<compile_context>
chip_gen: v6e
topology: v6e:2x2x1
jax: 0.10.0
libtpu: 0.0.40
codegen_flags: <defaults>
</compile_context>

<pallas_src>
import math
import functools

import jax
import jax.numpy as jnp
from jax import lax
from jax.experimental import pallas as pl
from jax.experimental.pallas import tpu as pltpu


# ----------------------------------------------------------------------------
# Fused MHA kernel: one invocation, whole batch + all heads in-kernel.
# ----------------------------------------------------------------------------

def _mha_kernel(xq_ref, xk_ref, xv_ref, wq_ref, wk_ref, wv_ref, wfc_ref,
                out_ref, attn_ref, *, B, Lq, Lk, n_heads, d_k, scale):
    xq = xq_ref[...]          # (B*Lq, d_model)
    xk = xk_ref[...]          # (B*Lk, d_model)
    xv = xv_ref[...]          # (B*Lk, d_model)

    # Fused Q/K/V projections on batch-flattened activations (weights are
    # VMEM-resident for the single step).
    q2 = jnp.dot(xq, wq_ref[...], preferred_element_type=jnp.float32)  # (B*Lq, H*d_k)
    k2 = jnp.dot(xk, wk_ref[...], preferred_element_type=jnp.float32)  # (B*Lk, H*d_k)
    v2 = jnp.dot(xv, wv_ref[...], preferred_element_type=jnp.float32)  # (B*Lk, H*d_v)

    # Per-head scores, batched over the folded batch axis: one MXU push per
    # head producing the full (B*Lq, B*Lk) cross matrix; the per-batch diagonal
    # (Lq, Lk) blocks are the true scores.
    s_all = []
    for h in range(n_heads):                      # static unroll, H is small
        qh = q2[:, h * d_k:(h + 1) * d_k]         # (B*Lq, d_k)  lane slice
        kh = k2[:, h * d_k:(h + 1) * d_k]         # (B*Lk, d_k)
        s_all.append(
            lax.dot_general(qh, kh, (((1,), (1,)), ((), ())),
                            preferred_element_type=jnp.float32) * scale)

    for b in range(B):                            # static unroll, B is small
        for h in range(n_heads):
            s = s_all[h][b * Lq:(b + 1) * Lq, b * Lk:(b + 1) * Lk]   # (Lq, Lk)
            m = jnp.max(s, axis=-1, keepdims=True)
            e = jnp.exp(s - m)
            denom = jnp.sum(e, axis=-1, keepdims=True)
            # Direct head-major store — no concat, no external transpose.
            attn_ref[b, h] = e * pl.reciprocal(denom)                # (Lq, Lk)

        # context[q, d] = (sum_k attn[q, k]) * (sum_v V[v, d]); the row-sum of
        # a softmax is 1, so context is the per-batch column sum of V
        # broadcast over queries. Output projection fused in.
        v_sum_b = jnp.sum(v2[b * Lk:(b + 1) * Lk, :], axis=0, keepdims=True)  # (1, H*d_v)
        out_b = jnp.dot(v_sum_b, wfc_ref[...],
                        preferred_element_type=jnp.float32)          # (1, d_model)
        out_ref[b] = jnp.broadcast_to(out_b, out_ref.shape[1:])      # (Lq, d_model)


def multi_head_attention(xq, xk, xv, params, n_heads, d_k, d_v):
    """xq: (B, Lq, d_model); xk, xv: (B, Lk, d_model).

    Returns (output (B, Lq, d_model), attn (B, H, Lq, Lk)) — same layout as the
    PyTorch module (attn_mask=None path).
    """
    B, Lq, d_model = xq.shape
    Lk = xk.shape[1]

    # Batch-flatten activations outside the kernel (free reshape of contiguous
    # leading dims) so the projection matmuls see (B*L, d_model).
    xq_flat = xq.reshape(B * Lq, d_model)
    xk_flat = xk.reshape(B * Lk, d_model)
    xv_flat = xv.reshape(B * Lk, d_model)

    kernel = functools.partial(
        _mha_kernel, B=B, Lq=Lq, Lk=Lk, n_heads=n_heads, d_k=d_k,
        scale=1.0 / math.sqrt(d_k))

    out, attn = pl.pallas_call(
        kernel,
        out_shape=(jax.ShapeDtypeStruct((B, Lq, d_model), jnp.float32),
                   jax.ShapeDtypeStruct((B, n_heads, Lq, Lk), jnp.float32)),
        grid=(1,),                      # single step: whole problem fits VMEM
        in_specs=[
            pl.BlockSpec((B * Lq, d_model), lambda i: (0, 0)),
            pl.BlockSpec((B * Lk, d_model), lambda i: (0, 0)),
            pl.BlockSpec((B * Lk, d_model), lambda i: (0, 0)),
            pl.BlockSpec((d_model, n_heads * d_k), lambda i: (0, 0)),
            pl.BlockSpec((d_model, n_heads * d_k), lambda i: (0, 0)),
            pl.BlockSpec((d_model, n_heads * d_v), lambda i: (0, 0)),
            pl.BlockSpec((n_heads * d_v, d_model), lambda i: (0, 0)),
        ],
        out_specs=(
            pl.BlockSpec((B, Lq, d_model), lambda i: (0, 0, 0)),
            pl.BlockSpec((B, n_heads, Lq, Lk), lambda i: (0, 0, 0, 0)),
        ),
        compiler_params=pltpu.CompilerParams(
            dimension_semantics=("arbitrary",)),   # single step; no megacore split
    )(xq_flat, xk_flat, xv_flat,
      params["wq"], params["wk"], params["wv"], params["fc"])

    return out, attn


# ----------------------------------------------------------------------------
# Pure-JAX reference (mirrors the PyTorch module exactly) for validation.
# ----------------------------------------------------------------------------

def mha_reference(xq, xk, xv, params, n_heads, d_k, d_v):
    B, Lq, d_model = xq.shape
    Lk = xk.shape[1]
    q = (xq @ params["wq"]).reshape(B, Lq, n_heads, d_k).transpose(0, 2, 1, 3)
    k = (xk @ params["wk"]).reshape(B, Lk, n_heads, d_k).transpose(0, 2, 1, 3)
    v = (xv @ params["wv"]).reshape(B, Lk, n_heads, d_v).transpose(0, 2, 1, 3)
    scores = jnp.einsum('bhqd,bhkd->bhqk', q, k) / math.sqrt(d_k)
    attn = jax.nn.softmax(scores, axis=-1)
    # Exactly the reference einsum (contracts 'k' and 'v' independently).
    ctx = jnp.einsum('bhqk,bhvd->bhqd', attn, v)
    ctx = ctx.transpose(0, 2, 1, 3).reshape(B, Lq, n_heads * d_v)
    out = ctx @ params["fc"]
    return out, attn


def init_params(key, d_model, d_k, d_v, n_heads):
    ks = jax.random.split(key, 4)

    def lin(k, fan_in, fan_out):
        return 0.1 * jax.random.normal(k, (fan_in, fan_out), dtype=jnp.float32)

    return {
        "wq": lin(ks[0], d_model, d_k * n_heads),
        "wk": lin(ks[1], d_model, d_k * n_heads),
        "wv": lin(ks[2], d_model, d_v * n_heads),
        "fc": lin(ks[3], n_heads * d_v, d_model),
    }


if __name__ == "__main__":
    B, Lq, Lk = 2, 8, 8
    d_model, d_k, d_v, n_heads = 32, 8, 8, 4

    key = jax.random.PRNGKey(0)
    kq, kk, kv, kp = jax.random.split(key, 4)
    xq = jax.random.normal(kq, (B, Lq, d_model), dtype=jnp.float32)
    xk = jax.random.normal(kk, (B, Lk, d_model), dtype=jnp.float32)
    xv = jax.random.normal(kv, (B, Lk, d_model), dtype=jnp.float32)
    params = init_params(kp, d_model, d_k, d_v, n_heads)

    out, attn = multi_head_attention(xq, xk, xv, params, n_heads, d_k, d_v)
    jax.block_until_ready((out, attn))

    assert out.shape == (B, Lq, d_model)
    assert attn.shape == (B, n_heads, Lq, Lk)

    out_ref, attn_ref = mha_reference(xq, xk, xv, params, n_heads, d_k, d_v)
    # Expected deviation is ~1e-6 (fp accumulation order + the analytically-1
    # softmax row-sum being folded away); tolerances are comfortably above it.
    assert jnp.allclose(out, out_ref, atol=1e-4, rtol=1e-4), "output mismatch"
    assert jnp.allclose(attn, attn_ref, atol=1e-4, rtol=1e-4), "attn mismatch"

    print("KERNEL_OK")
</pallas_src>

<mosaic_0001>
module attributes {stable_mosaic.version = 11 : i64} {
  func.func @_mha_kernel(%arg0: i32, %arg1: memref<16x32xf32, #tpu.memory_space<vmem>>, %arg2: memref<16x32xf32, #tpu.memory_space<vmem>>, %arg3: memref<16x32xf32, #tpu.memory_space<vmem>>, %arg4: memref<32x32xf32, #tpu.memory_space<vmem>>, %arg5: memref<32x32xf32, #tpu.memory_space<vmem>>, %arg6: memref<32x32xf32, #tpu.memory_space<vmem>>, %arg7: memref<32x32xf32, #tpu.memory_space<vmem>>, %arg8: memref<2x8x32xf32, #tpu.memory_space<vmem>>, %arg9: memref<2x4x8x8xf32, #tpu.memory_space<vmem>>) attributes {dimension_semantics = [#tpu.dimension_semantics<arbitrary>], iteration_bounds = array<i64: 1>, scalar_prefetch = 0 : i64, scratch_operands = 0 : i64, tpu.core_type = #tpu.core_type<tc>, window_params = [{pipeline_mode = #tpu.pipeline_mode<synchronous>, transform_indices = @transform_0, window_bounds = array<i64: 16, 32>}, {pipeline_mode = #tpu.pipeline_mode<synchronous>, transform_indices = @transform_1, window_bounds = array<i64: 16, 32>}, {pipeline_mode = #tpu.pipeline_mode<synchronous>, transform_indices = @transform_2, window_bounds = array<i64: 16, 32>}, {pipeline_mode = #tpu.pipeline_mode<synchronous>, transform_indices = @transform_3, window_bounds = array<i64: 32, 32>}, {pipeline_mode = #tpu.pipeline_mode<synchronous>, transform_indices = @transform_4, window_bounds = array<i64: 32, 32>}, {pipeline_mode = #tpu.pipeline_mode<synchronous>, transform_indices = @transform_5, window_bounds = array<i64: 32, 32>}, {pipeline_mode = #tpu.pipeline_mode<synchronous>, transform_indices = @transform_6, window_bounds = array<i64: 32, 32>}, {pipeline_mode = #tpu.pipeline_mode<synchronous>, transform_indices = @transform_7, window_bounds = array<i64: 2, 8, 32>}, {pipeline_mode = #tpu.pipeline_mode<synchronous>, transform_indices = @transform_8, window_bounds = array<i64: 2, 4, 8, 8>}]} {
    %c0 = arith.constant 0 : index
    %c0_0 = arith.constant 0 : index
    %0 = vector.load %arg1[%c0, %c0_0] : memref<16x32xf32, #tpu.memory_space<vmem>>, vector<16x32xf32>
    %c0_1 = arith.constant 0 : index
    %c0_2 = arith.constant 0 : index
    %1 = vector.load %arg2[%c0_1, %c0_2] : memref<16x32xf32, #tpu.memory_space<vmem>>, vector<16x32xf32>
    %c0_3 = arith.constant 0 : index
    %c0_4 = arith.constant 0 : index
    %2 = vector.load %arg3[%c0_3, %c0_4] : memref<16x32xf32, #tpu.memory_space<vmem>>, vector<16x32xf32>
    %c0_5 = arith.constant 0 : index
    %c0_6 = arith.constant 0 : index
    %3 = vector.load %arg4[%c0_5, %c0_6] : memref<32x32xf32, #tpu.memory_space<vmem>>, vector<32x32xf32>
    %cst = arith.constant dense<0.000000e+00> : vector<16x32xf32>
    %4 = tpu.matmul %0, %3, %cst {dimension_numbers = #tpu.dot_dimension_numbers<[1], [0], [0], [1], [0, 0, 1, 1], [], []>} : vector<16x32xf32>, vector<32x32xf32>, vector<16x32xf32> -> vector<16x32xf32>
    %c0_7 = arith.constant 0 : index
    %c0_8 = arith.constant 0 : index
    %5 = vector.load %arg5[%c0_7, %c0_8] : memref<32x32xf32, #tpu.memory_space<vmem>>, vector<32x32xf32>
    %cst_9 = arith.constant dense<0.000000e+00> : vector<16x32xf32>
    %6 = tpu.matmul %1, %5, %cst_9 {dimension_numbers = #tpu.dot_dimension_numbers<[1], [0], [0], [1], [0, 0, 1, 1], [], []>} : vector<16x32xf32>, vector<32x32xf32>, vector<16x32xf32> -> vector<16x32xf32>
    %c0_10 = arith.constant 0 : index
    %c0_11 = arith.constant 0 : index
    %7 = vector.load %arg6[%c0_10, %c0_11] : memref<32x32xf32, #tpu.memory_space<vmem>>, vector<32x32xf32>
    %cst_12 = arith.constant dense<0.000000e+00> : vector<16x32xf32>
    %8 = tpu.matmul %2, %7, %cst_12 {dimension_numbers = #tpu.dot_dimension_numbers<[1], [0], [0], [1], [0, 0, 1, 1], [], []>} : vector<16x32xf32>, vector<32x32xf32>, vector<16x32xf32> -> vector<16x32xf32>
    %9 = vector.extract_strided_slice %4 {offsets = [0, 0], sizes = [16, 8], strides = [1, 1]} : vector<16x32xf32> to vector<16x8xf32>
    %10 = vector.extract_strided_slice %6 {offsets = [0, 0], sizes = [16, 8], strides = [1, 1]} : vector<16x32xf32> to vector<16x8xf32>
    %cst_13 = arith.constant dense<0.000000e+00> : vector<16x16xf32>
    %11 = tpu.matmul %9, %10, %cst_13 {dimension_numbers = #tpu.dot_dimension_numbers<[1], [1], [0], [0], [0, 0, 1, 0], [], []>} : vector<16x8xf32>, vector<16x8xf32>, vector<16x16xf32> -> vector<16x16xf32>
    %cst_14 = arith.constant 0.353553385 : f32
    %12 = vector.broadcast %cst_14 : f32 to vector<16x16xf32>
    %13 = arith.mulf %11, %12 : vector<16x16xf32>
    %14 = vector.extract_strided_slice %4 {offsets = [0, 8], sizes = [16, 8], strides = [1, 1]} : vector<16x32xf32> to vector<16x8xf32>
    %15 = vector.extract_strided_slice %6 {offsets = [0, 8], sizes = [16, 8], strides = [1, 1]} : vector<16x32xf32> to vector<16x8xf32>
    %cst_15 = arith.constant dense<0.000000e+00> : vector<16x16xf32>
    %16 = tpu.matmul %14, %15, %cst_15 {dimension_numbers = #tpu.dot_dimension_numbers<[1], [1], [0], [0], [0, 0, 1, 0], [], []>} : vector<16x8xf32>, vector<16x8xf32>, vector<16x16xf32> -> vector<16x16xf32>
    %cst_16 = arith.constant 0.353553385 : f32
    %17 = vector.broadcast %cst_16 : f32 to vector<16x16xf32>
    %18 = arith.mulf %16, %17 : vector<16x16xf32>
    %19 = vector.extract_strided_slice %4 {offsets = [0, 16], sizes = [16, 8], strides = [1, 1]} : vector<16x32xf32> to vector<16x8xf32>
    %20 = vector.extract_strided_slice %6 {offsets = [0, 16], sizes = [16, 8], strides = [1, 1]} : vector<16x32xf32> to vector<16x8xf32>
    %cst_17 = arith.constant dense<0.000000e+00> : vector<16x16xf32>
    %21 = tpu.matmul %19, %20, %cst_17 {dimension_numbers = #tpu.dot_dimension_numbers<[1], [1], [0], [0], [0, 0, 1, 0], [], []>} : vector<16x8xf32>, vector<16x8xf32>, vector<16x16xf32> -> vector<16x16xf32>
    %cst_18 = arith.constant 0.353553385 : f32
    %22 = vector.broadcast %cst_18 : f32 to vector<16x16xf32>
    %23 = arith.mulf %21, %22 : vector<16x16xf32>
    %24 = vector.extract_strided_slice %4 {offsets = [0, 24], sizes = [16, 8], strides = [1, 1]} : vector<16x32xf32> to vector<16x8xf32>
    %25 = vector.extract_strided_slice %6 {offsets = [0, 24], sizes = [16, 8], strides = [1, 1]} : vector<16x32xf32> to vector<16x8xf32>
    %cst_19 = arith.constant dense<0.000000e+00> : vector<16x16xf32>
    %26 = tpu.matmul %24, %25, %cst_19 {dimension_numbers = #tpu.dot_dimension_numbers<[1], [1], [0], [0], [0, 0, 1, 0], [], []>} : vector<16x8xf32>, vector<16x8xf32>, vector<16x16xf32> -> vector<16x16xf32>
    %cst_20 = arith.constant 0.353553385 : f32
    %27 = vector.broadcast %cst_20 : f32 to vector<16x16xf32>
    %28 = arith.mulf %26, %27 : vector<16x16xf32>
    %29 = vector.extract_strided_slice %13 {offsets = [0, 0], sizes = [8, 8], strides = [1, 1]} : vector<16x16xf32> to vector<8x8xf32>
    %cst_21 = arith.constant dense<0xFF800000> : vector<8xf32>
    %30 = vector.multi_reduction <maximumf>, %29, %cst_21 [1] : vector<8x8xf32> to vector<8xf32>
    %31 = vector.shape_cast %30 : vector<8xf32> to vector<8x1xf32>
    %32 = vector.broadcast %31 : vector<8x1xf32> to vector<8x8xf32>
    %33 = arith.subf %29, %32 : vector<8x8xf32>
    %34 = math.exp %33 : vector<8x8xf32>
    %cst_22 = arith.constant dense<0.000000e+00> : vector<8xf32>
    %35 = vector.multi_reduction <add>, %34, %cst_22 [1] : vector<8x8xf32> to vector<8xf32>
    %36 = vector.shape_cast %35 : vector<8xf32> to vector<8x1xf32>
    %37 = tpu.reciprocal %36 : vector<8x1xf32> -> vector<8x1xf32>
    %38 = vector.broadcast %37 : vector<8x1xf32> to vector<8x8xf32>
    %39 = arith.mulf %34, %38 : vector<8x8xf32>
    %c0_23 = arith.constant 0 : index
    %c0_24 = arith.constant 0 : index
    %c0_25 = arith.constant 0 : index
    %c0_26 = arith.constant 0 : index
    %40 = vector.load %arg9[%c0_23, %c0_24, %c0_25, %c0_26] : memref<2x4x8x8xf32, #tpu.memory_space<vmem>>, vector<1x1x8x8xf32>
    %41 = vector.shape_cast %40 : vector<1x1x8x8xf32> to vector<8x8xf32>
    %42 = vector.shape_cast %39 : vector<8x8xf32> to vector<1x1x8x8xf32>
    tpu.vector_store %arg9[%c0_23, %c0_24, %c0_25, %c0_26], %42 {strides = array<i32>} : memref<2x4x8x8xf32, #tpu.memory_space<vmem>>, vector<1x1x8x8xf32>,
    %43 = vector.extract_strided_slice %18 {offsets = [0, 0], sizes = [8, 8], strides = [1, 1]} : vector<16x16xf32> to vector<8x8xf32>
    %cst_27 = arith.constant dense<0xFF800000> : vector<8xf32>
    %44 = vector.multi_reduction <maximumf>, %43, %cst_27 [1] : vector<8x8xf32> to vector<8xf32>
    %45 = vector.shape_cast %44 : vector<8xf32> to vector<8x1xf32>
    %46 = vector.broadcast %45 : vector<8x1xf32> to vector<8x8xf32>
    %47 = arith.subf %43, %46 : vector<8x8xf32>
    %48 = math.exp %47 : vector<8x8xf32>
    %cst_28 = arith.constant dense<0.000000e+00> : vector<8xf32>
    %49 = vector.multi_reduction <add>, %48, %cst_28 [1] : vector<8x8xf32> to vector<8xf32>
    %50 = vector.shape_cast %49 : vector<8xf32> to vector<8x1xf32>
    %51 = tpu.reciprocal %50 : vector<8x1xf32> -> vector<8x1xf32>
    %52 = vector.broadcast %51 : vector<8x1xf32> to vector<8x8xf32>
    %53 = arith.mulf %48, %52 : vector<8x8xf32>
    %c0_29 = arith.constant 0 : index
    %c1 = arith.constant 1 : index
    %c0_30 = arith.constant 0 : index
    %c0_31 = arith.constant 0 : index
    %54 = vector.load %arg9[%c0_29, %c1, %c0_30, %c0_31] : memref<2x4x8x8xf32, #tpu.memory_space<vmem>>, vector<1x1x8x8xf32>
    %55 = vector.shape_cast %54 : vector<1x1x8x8xf32> to vector<8x8xf32>
    %56 = vector.shape_cast %53 : vector<8x8xf32> to vector<1x1x8x8xf32>
    tpu.vector_store %arg9[%c0_29, %c1, %c0_30, %c0_31], %56 {strides = array<i32>} : memref<2x4x8x8xf32, #tpu.memory_space<vmem>>, vector<1x1x8x8xf32>,
    %57 = vector.extract_strided_slice %23 {offsets = [0, 0], sizes = [8, 8], strides = [1, 1]} : vector<16x16xf32> to vector<8x8xf32>
    %cst_32 = arith.constant dense<0xFF800000> : vector<8xf32>
    %58 = vector.multi_reduction <maximumf>, %57, %cst_32 [1] : vector<8x8xf32> to vector<8xf32>
    %59 = vector.shape_cast %58 : vector<8xf32> to vector<8x1xf32>
    %60 = vector.broadcast %59 : vector<8x1xf32> to vector<8x8xf32>
    %61 = arith.subf %57, %60 : vector<8x8xf32>
    %62 = math.exp %61 : vector<8x8xf32>
    %cst_33 = arith.constant dense<0.000000e+00> : vector<8xf32>
    %63 = vector.multi_reduction <add>, %62, %cst_33 [1] : vector<8x8xf32> to vector<8xf32>
    %64 = vector.shape_cast %63 : vector<8xf32> to vector<8x1xf32>
    %65 = tpu.reciprocal %64 : vector<8x1xf32> -> vector<8x1xf32>
    %66 = vector.broadcast %65 : vector<8x1xf32> to vector<8x8xf32>
    %67 = arith.mulf %62, %66 : vector<8x8xf32>
    %c0_34 = arith.constant 0 : index
    %c2 = arith.constant 2 : index
    %c0_35 = arith.constant 0 : index
    %c0_36 = arith.constant 0 : index
    %68 = vector.load %arg9[%c0_34, %c2, %c0_35, %c0_36] : memref<2x4x8x8xf32, #tpu.memory_space<vmem>>, vector<1x1x8x8xf32>
    %69 = vector.shape_cast %68 : vector<1x1x8x8xf32> to vector<8x8xf32>
    %70 = vector.shape_cast %67 : vector<8x8xf32> to vector<1x1x8x8xf32>
    tpu.vector_store %arg9[%c0_34, %c2, %c0_35, %c0_36], %70 {strides = array<i32>} : memref<2x4x8x8xf32, #tpu.memory_space<vmem>>, vector<1x1x8x8xf32>,
    %71 = vector.extract_strided_slice %28 {offsets = [0, 0], sizes = [8, 8], strides = [1, 1]} : vector<16x16xf32> to vector<8x8xf32>
    %cst_37 = arith.constant dense<0xFF800000> : vector<8xf32>
    %72 = vector.multi_reduction <maximumf>, %71, %cst_37 [1] : vector<8x8xf32> to vector<8xf32>
    %73 = vector.shape_cast %72 : vector<8xf32> to vector<8x1xf32>
    %74 = vector.broadcast %73 : vector<8x1xf32> to vector<8x8xf32>
    %75 = arith.subf %71, %74 : vector<8x8xf32>
    %76 = math.exp %75 : vector<8x8xf32>
    %cst_38 = arith.constant dense<0.000000e+00> : vector<8xf32>
    %77 = vector.multi_reduction <add>, %76, %cst_38 [1] : vector<8x8xf32> to vector<8xf32>
    %78 = vector.shape_cast %77 : vector<8xf32> to vector<8x1xf32>
    %79 = tpu.reciprocal %78 : vector<8x1xf32> -> vector<8x1xf32>
    %80 = vector.broadcast %79 : vector<8x1xf32> to vector<8x8xf32>
    %81 = arith.mulf %76, %80 : vector<8x8xf32>
    %c0_39 = arith.constant 0 : index
    %c3 = arith.constant 3 : index
    %c0_40 = arith.constant 0 : index
    %c0_41 = arith.constant 0 : index
    %82 = vector.load %arg9[%c0_39, %c3, %c0_40, %c0_41] : memref<2x4x8x8xf32, #tpu.memory_space<vmem>>, vector<1x1x8x8xf32>
    %83 = vector.shape_cast %82 : vector<1x1x8x8xf32> to vector<8x8xf32>
    %84 = vector.shape_cast %81 : vector<8x8xf32> to vector<1x1x8x8xf32>
    tpu.vector_store %arg9[%c0_39, %c3, %c0_40, %c0_41], %84 {strides = array<i32>} : memref<2x4x8x8xf32, #tpu.memory_space<vmem>>, vector<1x1x8x8xf32>,
    %85 = vector.extract_strided_slice %8 {offsets = [0, 0], sizes = [8, 32], strides = [1, 1]} : vector<16x32xf32> to vector<8x32xf32>
    %cst_42 = arith.constant dense<0.000000e+00> : vector<32xf32>
    %86 = vector.multi_reduction <add>, %85, %cst_42 [0] : vector<8x32xf32> to vector<32xf32>
    %87 = vector.shape_cast %86 : vector<32xf32> to vector<1x32xf32>
    %c0_43 = arith.constant 0 : index
    %c0_44 = arith.constant 0 : index
    %88 = vector.load %arg7[%c0_43, %c0_44] : memref<32x32xf32, #tpu.memory_space<vmem>>, vector<32x32xf32>
    %cst_45 = arith.constant dense<0.000000e+00> : vector<1x32xf32>
    %89 = tpu.matmul %87, %88, %cst_45 {dimension_numbers = #tpu.dot_dimension_numbers<[1], [0], [0], [1], [0, 0, 1, 1], [], []>} : vector<1x32xf32>, vector<32x32xf32>, vector<1x32xf32> -> vector<1x32xf32>
    %90 = vector.shape_cast %89 : vector<1x32xf32> to vector<1x32xf32>
    %91 = vector.broadcast %90 : vector<1x32xf32> to vector<8x32xf32>
    %c0_46 = arith.constant 0 : index
    %c0_47 = arith.constant 0 : index
    %c0_48 = arith.constant 0 : index
    %92 = vector.load %arg8[%c0_46, %c0_47, %c0_48] : memref<2x8x32xf32, #tpu.memory_space<vmem>>, vector<1x8x32xf32>
    %93 = vector.shape_cast %92 : vector<1x8x32xf32> to vector<8x32xf32>
    %94 = vector.shape_cast %91 : vector<8x32xf32> to vector<1x8x32xf32>
    tpu.vector_store %arg8[%c0_46, %c0_47, %c0_48], %94 {strides = array<i32>} : memref<2x8x32xf32, #tpu.memory_space<vmem>>, vector<1x8x32xf32>,
    %95 = vector.extract_strided_slice %13 {offsets = [8, 8], sizes = [8, 8], strides = [1, 1]} : vector<16x16xf32> to vector<8x8xf32>
    %cst_49 = arith.constant dense<0xFF800000> : vector<8xf32>
    %96 = vector.multi_reduction <maximumf>, %95, %cst_49 [1] : vector<8x8xf32> to vector<8xf32>
    %97 = vector.shape_cast %96 : vector<8xf32> to vector<8x1xf32>
    %98 = vector.broadcast %97 : vector<8x1xf32> to vector<8x8xf32>
    %99 = arith.subf %95, %98 : vector<8x8xf32>
    %100 = math.exp %99 : vector<8x8xf32>
    %cst_50 = arith.constant dense<0.000000e+00> : vector<8xf32>
    %101 = vector.multi_reduction <add>, %100, %cst_50 [1] : vector<8x8xf32> to vector<8xf32>
    %102 = vector.shape_cast %101 : vector<8xf32> to vector<8x1xf32>
    %103 = tpu.reciprocal %102 : vector<8x1xf32> -> vector<8x1xf32>
    %104 = vector.broadcast %103 : vector<8x1xf32> to vector<8x8xf32>
    %105 = arith.mulf %100, %104 : vector<8x8xf32>
    %c1_51 = arith.constant 1 : index
    %c0_52 = arith.constant 0 : index
    %c0_53 = arith.constant 0 : index
    %c0_54 = arith.constant 0 : index
    %106 = vector.load %arg9[%c1_51, %c0_52, %c0_53, %c0_54] : memref<2x4x8x8xf32, #tpu.memory_space<vmem>>, vector<1x1x8x8xf32>
    %107 = vector.shape_cast %106 : vector<1x1x8x8xf32> to vector<8x8xf32>
    %108 = vector.shape_cast %105 : vector<8x8xf32> to vector<1x1x8x8xf32>
    tpu.vector_store %arg9[%c1_51, %c0_52, %c0_53, %c0_54], %108 {strides = array<i32>} : memref<2x4x8x8xf32, #tpu.memory_space<vmem>>, vector<1x1x8x8xf32>,
    %109 = vector.extract_strided_slice %18 {offsets = [8, 8], sizes = [8, 8], strides = [1, 1]} : vector<16x16xf32> to vector<8x8xf32>
    %cst_55 = arith.constant dense<0xFF800000> : vector<8xf32>
    %110 = vector.multi_reduction <maximumf>, %109, %cst_55 [1] : vector<8x8xf32> to vector<8xf32>
    %111 = vector.shape_cast %110 : vector<8xf32> to vector<8x1xf32>
    %112 = vector.broadcast %111 : vector<8x1xf32> to vector<8x8xf32>
    %113 = arith.subf %109, %112 : vector<8x8xf32>
    %114 = math.exp %113 : vector<8x8xf32>
    %cst_56 = arith.constant dense<0.000000e+00> : vector<8xf32>
    %115 = vector.multi_reduction <add>, %114, %cst_56 [1] : vector<8x8xf32> to vector<8xf32>
    %116 = vector.shape_cast %115 : vector<8xf32> to vector<8x1xf32>
    %117 = tpu.reciprocal %116 : vector<8x1xf32> -> vector<8x1xf32>
    %118 = vector.broadcast %117 : vector<8x1xf32> to vector<8x8xf32>
    %119 = arith.mulf %114, %118 : vector<8x8xf32>
    %c1_57 = arith.constant 1 : index
    %c1_58 = arith.constant 1 : index
    %c0_59 = arith.constant 0 : index
    %c0_60 = arith.constant 0 : index
    %120 = vector.load %arg9[%c1_57, %c1_58, %c0_59, %c0_60] : memref<2x4x8x8xf32, #tpu.memory_space<vmem>>, vector<1x1x8x8xf32>
    %121 = vector.shape_cast %120 : vector<1x1x8x8xf32> to vector<8x8xf32>
    %122 = vector.shape_cast %119 : vector<8x8xf32> to vector<1x1x8x8xf32>
    tpu.vector_store %arg9[%c1_57, %c1_58, %c0_59, %c0_60], %122 {strides = array<i32>} : memref<2x4x8x8xf32, #tpu.memory_space<vmem>>, vector<1x1x8x8xf32>,
    %123 = vector.extract_strided_slice %23 {offsets = [8, 8], sizes = [8, 8], strides = [1, 1]} : vector<16x16xf32> to vector<8x8xf32>
    %cst_61 = arith.constant dense<0xFF800000> : vector<8xf32>
    %124 = vector.multi_reduction <maximumf>, %123, %cst_61 [1] : vector<8x8xf32> to vector<8xf32>
    %125 = vector.shape_cast %124 : vector<8xf32> to vector<8x1xf32>
    %126 = vector.broadcast %125 : vector<8x1xf32> to vector<8x8xf32>
    %127 = arith.subf %123, %126 : vector<8x8xf32>
    %128 = math.exp %127 : vector<8x8xf32>
    %cst_62 = arith.constant dense<0.000000e+00> : vector<8xf32>
    %129 = vector.multi_reduction <add>, %128, %cst_62 [1] : vector<8x8xf32> to vector<8xf32>
    %130 = vector.shape_cast %129 : vector<8xf32> to vector<8x1xf32>
    %131 = tpu.reciprocal %130 : vector<8x1xf32> -> vector<8x1xf32>
    %132 = vector.broadcast %131 : vector<8x1xf32> to vector<8x8xf32>
    %133 = arith.mulf %128, %132 : vector<8x8xf32>
    %c1_63 = arith.constant 1 : index
    %c2_64 = arith.constant 2 : index
    %c0_65 = arith.constant 0 : index
    %c0_66 = arith.constant 0 : index
    %134 = vector.load %arg9[%c1_63, %c2_64, %c0_65, %c0_66] : memref<2x4x8x8xf32, #tpu.memory_space<vmem>>, vector<1x1x8x8xf32>
    %135 = vector.shape_cast %134 : vector<1x1x8x8xf32> to vector<8x8xf32>
    %136 = vector.shape_cast %133 : vector<8x8xf32> to vector<1x1x8x8xf32>
    tpu.vector_store %arg9[%c1_63, %c2_64, %c0_65, %c0_66], %136 {strides = array<i32>} : memref<2x4x8x8xf32, #tpu.memory_space<vmem>>, vector<1x1x8x8xf32>,
    %137 = vector.extract_strided_slice %28 {offsets = [8, 8], sizes = [8, 8], strides = [1, 1]} : vector<16x16xf32> to vector<8x8xf32>
    %cst_67 = arith.constant dense<0xFF800000> : vector<8xf32>
    %138 = vector.multi_reduction <maximumf>, %137, %cst_67 [1] : vector<8x8xf32> to vector<8xf32>
    %139 = vector.shape_cast %138 : vector<8xf32> to vector<8x1xf32>
    %140 = vector.broadcast %139 : vector<8x1xf32> to vector<8x8xf32>
    %141 = arith.subf %137, %140 : vector<8x8xf32>
    %142 = math.exp %141 : vector<8x8xf32>
    %cst_68 = arith.constant dense<0.000000e+00> : vector<8xf32>
    %143 = vector.multi_reduction <add>, %142, %cst_68 [1] : vector<8x8xf32> to vector<8xf32>
    %144 = vector.shape_cast %143 : vector<8xf32> to vector<8x1xf32>
    %145 = tpu.reciprocal %144 : vector<8x1xf32> -> vector<8x1xf32>
    %146 = vector.broadcast %145 : vector<8x1xf32> to vector<8x8xf32>
    %147 = arith.mulf %142, %146 : vector<8x8xf32>
    %c1_69 = arith.constant 1 : index
    %c3_70 = arith.constant 3 : index
    %c0_71 = arith.constant 0 : index
    %c0_72 = arith.constant 0 : index
    %148 = vector.load %arg9[%c1_69, %c3_70, %c0_71, %c0_72] : memref<2x4x8x8xf32, #tpu.memory_space<vmem>>, vector<1x1x8x8xf32>
    %149 = vector.shape_cast %148 : vector<1x1x8x8xf32> to vector<8x8xf32>
    %150 = vector.shape_cast %147 : vector<8x8xf32> to vector<1x1x8x8xf32>
    tpu.vector_store %arg9[%c1_69, %c3_70, %c0_71, %c0_72], %150 {strides = array<i32>} : memref<2x4x8x8xf32, #tpu.memory_space<vmem>>, vector<1x1x8x8xf32>,
    %151 = vector.extract_strided_slice %8 {offsets = [8, 0], sizes = [8, 32], strides = [1, 1]} : vector<16x32xf32> to vector<8x32xf32>
    %cst_73 = arith.constant dense<0.000000e+00> : vector<32xf32>
    %152 = vector.multi_reduction <add>, %151, %cst_73 [0] : vector<8x32xf32> to vector<32xf32>
    %153 = vector.shape_cast %152 : vector<32xf32> to vector<1x32xf32>
    %c0_74 = arith.constant 0 : index
    %c0_75 = arith.constant 0 : index
    %154 = vector.load %arg7[%c0_74, %c0_75] : memref<32x32xf32, #tpu.memory_space<vmem>>, vector<32x32xf32>
    %cst_76 = arith.constant dense<0.000000e+00> : vector<1x32xf32>
    %155 = tpu.matmul %153, %154, %cst_76 {dimension_numbers = #tpu.dot_dimension_numbers<[1], [0], [0], [1], [0, 0, 1, 1], [], []>} : vector<1x32xf32>, vector<32x32xf32>, vector<1x32xf32> -> vector<1x32xf32>
    %156 = vector.shape_cast %155 : vector<1x32xf32> to vector<1x32xf32>
    %157 = vector.broadcast %156 : vector<1x32xf32> to vector<8x32xf32>
    %c1_77 = arith.constant 1 : index
    %c0_78 = arith.constant 0 : index
    %c0_79 = arith.constant 0 : index
    %158 = vector.load %arg8[%c1_77, %c0_78, %c0_79] : memref<2x8x32xf32, #tpu.memory_space<vmem>>, vector<1x8x32xf32>
    %159 = vector.shape_cast %158 : vector<1x8x32xf32> to vector<8x32xf32>
    %160 = vector.shape_cast %157 : vector<8x32xf32> to vector<1x8x32xf32>
    tpu.vector_store %arg8[%c1_77, %c0_78, %c0_79], %160 {strides = array<i32>} : memref<2x8x32xf32, #tpu.memory_space<vmem>>, vector<1x8x32xf32>,
    return
  }
  func.func @transform_0(%arg0: i32) -> (i32, i32) {
    %c0_i32 = arith.constant 0 : i32
    %c0_i32_0 = arith.constant 0 : i32
    %c0_i32_1 = arith.constant 0 : i32
    return %c0_i32, %c0_i32_0 : i32, i32
  }
  func.func @transform_1(%arg0: i32) -> (i32, i32) {
    %c0_i32 = arith.constant 0 : i32
    %c0_i32_0 = arith.constant 0 : i32
    %c0_i32_1 = arith.constant 0 : i32
    return %c0_i32, %c0_i32_0 : i32, i32
  }
  func.func @transform_2(%arg0: i32) -> (i32, i32) {
    %c0_i32 = arith.constant 0 : i32
    %c0_i32_0 = arith.constant 0 : i32
    %c0_i32_1 = arith.constant 0 : i32
    return %c0_i32, %c0_i32_0 : i32, i32
  }
  func.func @transform_3(%arg0: i32) -> (i32, i32) {
    %c0_i32 = arith.constant 0 : i32
    %c0_i32_0 = arith.constant 0 : i32
    %c0_i32_1 = arith.constant 0 : i32
    return %c0_i32, %c0_i32_0 : i32, i32
  }
  func.func @transform_4(%arg0: i32) -> (i32, i32) {
    %c0_i32 = arith.constant 0 : i32
    %c0_i32_0 = arith.constant 0 : i32
    %c0_i32_1 = arith.constant 0 : i32
    return %c0_i32, %c0_i32_0 : i32, i32
  }
  func.func @transform_5(%arg0: i32) -> (i32, i32) {
    %c0_i32 = arith.constant 0 : i32
    %c0_i32_0 = arith.constant 0 : i32
    %c0_i32_1 = arith.constant 0 : i32
    return %c0_i32, %c0_i32_0 : i32, i32
  }
  func.func @transform_6(%arg0: i32) -> (i32, i32) {
    %c0_i32 = arith.constant 0 : i32
    %c0_i32_0 = arith.constant 0 : i32
    %c0_i32_1 = arith.constant 0 : i32
    return %c0_i32, %c0_i32_0 : i32, i32
  }
  func.func @transform_7(%arg0: i32) -> (i32, i32, i32) {
    %c0_i32 = arith.constant 0 : i32
    %c0_i32_0 = arith.constant 0 : i32
    %c0_i32_1 = arith.constant 0 : i32
    %c0_i32_2 = arith.constant 0 : i32
    return %c0_i32, %c0_i32_0, %c0_i32_1 : i32, i32, i32
  }
  func.func @transform_8(%arg0: i32) -> (i32, i32, i32, i32) {
    %c0_i32 = arith.constant 0 : i32
    %c0_i32_0 = arith.constant 0 : i32
    %c0_i32_1 = arith.constant 0 : i32
    %c0_i32_2 = arith.constant 0 : i32
    %c0_i32_3 = arith.constant 0 : i32
    return %c0_i32, %c0_i32_0, %c0_i32_1, %c0_i32_2 : i32, i32, i32, i32
  }
}

</mosaic_0001>

<llo_original>
// kernel: tpu_custom_call.1
$region0: #{tpu_custom_call.1}
  #allocation0 [shape = 'u32[]', space=smem, size = 0x4, offset = 0x4, fixed_abs, tag = 'smem constant byte address 0x4 - core index']
  #allocation1 [shape = 'u32[144,128]{1,0:T(1,128)}', space=vmem, size = 0x12000, scoped, tag = 'internal scratch']
  %s0 = inlined_call_operand.hbm [shape: f32[16,32], index: 0, kind: input, shape index: {}]
  %s1 = inlined_call_operand.hbm [shape: f32[16,32], index: 1, kind: input, shape index: {}]
  %s2 = inlined_call_operand.hbm [shape: f32[16,32], index: 2, kind: input, shape index: {}]
  %s3 = inlined_call_operand.hbm [shape: f32[32,32], index: 3, kind: input, shape index: {}]
  %s4 = inlined_call_operand.hbm [shape: f32[32,32], index: 4, kind: input, shape index: {}]
  %s5 = inlined_call_operand.hbm [shape: f32[32,32], index: 5, kind: input, shape index: {}]
  %s6 = inlined_call_operand.hbm [shape: f32[32,32], index: 6, kind: input, shape index: {}]
  %s7 = inlined_call_operand.hbm [shape: f32[2,8,32], index: 7, kind: output, shape index: {0}]
  %s8 = inlined_call_operand.hbm [shape: f32[2,4,8,8], index: 8, kind: output, shape index: {1}]
  %9 = xla_tuple %s7, %s8
  %s10 = sld [smem:[#allocation0]]
  $region74: #{tpu_custom_call.1} parent=0
    _
  %s12 = ssub.s32 1, %s10
  %s13 = scalar_select 0, %s12, %s10
  $region1: #{tpu_custom_call.1} parent=0
    #allocation2 [shape = 'u8[8192]{0}', space=vmem, size = 0x2000, scoped, tag = 'input window, operand 0, single buffered']
    #allocation3 [shape = 's32[1]{0}', space=sflag, size = 0x4, scoped, tag = 'scoped memory for tpu_custom_call.1']
    #allocation4 [shape = 's32[1]{0}', space=sflag, size = 0x4, scoped, tag = 'scoped memory for tpu_custom_call.1']
    #allocation5 [shape = 'u8[8192]{0}', space=vmem, size = 0x2000, scoped, tag = 'input window, operand 1, single buffered']
    #allocation6 [shape = 's32[1]{0}', space=sflag, size = 0x4, scoped, tag = 'scoped memory for tpu_custom_call.1']
    #allocation7 [shape = 'u8[8192]{0}', space=vmem, size = 0x2000, scoped, tag = 'input window, operand 2, single buffered']
    #allocation8 [shape = 'u8[16384]{0}', space=vmem, size = 0x4000, scoped, tag = 'input window, operand 3, single buffered']
    #allocation9 [shape = 's32[1]{0}', space=sflag, size = 0x4, scoped, tag = 'scoped memory for tpu_custom_call.1']
    #allocation10 [shape = 'u8[16384]{0}', space=vmem, size = 0x4000, scoped, tag = 'input window, operand 4, single buffered']
    #allocation11 [shape = 'u8[16384]{0}', space=vmem, size = 0x4000, scoped, tag = 'input window, operand 5, single buffered']
    #allocation12 [shape = 's32[1]{0}', space=sflag, size = 0x4, scoped, tag = 'scoped memory for tpu_custom_call.1']
    #allocation13 [shape = 'u8[16384]{0}', space=vmem, size = 0x4000, scoped, tag = 'input window, operand 6, single buffered']
    #allocation14 [shape = 'u8[8192]{0}', space=vmem, size = 0x2000, scoped, tag = 'output window, operand 0, single buffered']
    #allocation15 [shape = 'u8[32768]{0}', space=vmem, size = 0x8000, scoped, tag = 'output window, operand 1, single buffered']
    #allocation16 [shape = 's32[1]{0}', space=sflag, size = 0x4, scoped, tag = 'scoped memory for tpu_custom_call.1']
    %14 = vsyncpa [#allocation3], 0
    %15 = vsyncpa [#allocation6], 0
    %16 = vsyncpa [#allocation9], 0
    %17 = vsyncpa [#allocation12], 0
    %18 = vsyncpa [#allocation4], 0
    %19 = vsyncpa [#allocation16], 0
    // Predicated region
    $region2: #{tpu_custom_call.1} parent=1 // pred_check
      _
    $region3: #{tpu_custom_call.1} parent=1 // pred_check_branch
      %21 = sbr.rel (0) target = $region5
    $region4: #{tpu_custom_call.1} parent=1 // pred_region
      %s23 = ssub.s32 256, 256
      %24 = vsyncadd [#allocation3], %s23
      %s25 = sshll.u32 [#allocation2], 4
      %s26 = int_to_ptr.vmem [resolvable:$true] %s25
      %31 = dma.hbm_to_vmem [thread:$0]  %s0, 256, %s26, [#allocation3], 128, 128, 8
    $region5: #{tpu_custom_call.1} parent=1 // pred_fallthru
      _
    // Predicated region
    $region6: #{tpu_custom_call.1} parent=1 // pred_check
      _
    $region7: #{tpu_custom_call.1} parent=1 // pred_check_branch
      %33 = sbr.rel (0) target = $region9
    $region8: #{tpu_custom_call.1} parent=1 // pred_region
      %s35 = ssub.s32 256, 256
      %36 = vsyncadd [#allocation6], %s35
      %s37 = sshll.u32 [#allocation5], 4
      %s38 = int_to_ptr.vmem [resolvable:$true] %s37
      %43 = dma.hbm_to_vmem [thread:$0]  %s1, 256, %s38, [#allocation6], 128, 128, 8
    $region9: #{tpu_custom_call.1} parent=1 // pred_fallthru
      _
    // Predicated region
    $region10: #{tpu_custom_call.1} parent=1 // pred_check
      _
    $region11: #{tpu_custom_call.1} parent=1 // pred_check_branch
      %45 = sbr.rel (0) target = $region13
    $region12: #{tpu_custom_call.1} parent=1 // pred_region
      %s47 = ssub.s32 256, 256
      %48 = vsyncadd [#allocation6], %s47
      %s49 = sshll.u32 [#allocation7], 4
      %s50 = int_to_ptr.vmem [resolvable:$true] %s49
      %55 = dma.hbm_to_vmem [thread:$0]  %s2, 256, %s50, [#allocation6], 128, 128, 8
    $region13: #{tpu_custom_call.1} parent=1 // pred_fallthru
      _
    // Predicated region
    $region14: #{tpu_custom_call.1} parent=1 // pred_check
      _
    $region15: #{tpu_custom_call.1} parent=1 // pred_check_branch
      %57 = sbr.rel (0) target = $region17
    $region16: #{tpu_custom_call.1} parent=1 // pred_region
      %s59 = ssub.s32 512, 512
      %60 = vsyncadd [#allocation9], %s59
      %s61 = sshll.u32 [#allocation8], 4
      %s62 = int_to_ptr.vmem [resolvable:$true] %s61
      %67 = dma.hbm_to_vmem [thread:$0]  %s3, 512, %s62, [#allocation9], 128, 128, 8
    $region17: #{tpu_custom_call.1} parent=1 // pred_fallthru
      _
    // Predicated region
    $region18: #{tpu_custom_call.1} parent=1 // pred_check
      _
    $region19: #{tpu_custom_call.1} parent=1 // pred_check_branch
      %69 = sbr.rel (0) target = $region21
    $region20: #{tpu_custom_call.1} parent=1 // pred_region
      %s71 = ssub.s32 512, 512
      %72 = vsyncadd [#allocation9], %s71
      %s73 = sshll.u32 [#allocation10], 4
      %s74 = int_to_ptr.vmem [resolvable:$true] %s73
      %79 = dma.hbm_to_vmem [thread:$0]  %s4, 512, %s74, [#allocation9], 128, 128, 8
    $region21: #{tpu_custom_call.1} parent=1 // pred_fallthru
      _
    // Predicated region
    $region22: #{tpu_custom_call.1} parent=1 // pred_check
      _
    $region23: #{tpu_custom_call.1} parent=1 // pred_check_branch
      %81 = sbr.rel (0) target = $region25
    $region24: #{tpu_custom_call.1} parent=1 // pred_region
      %s83 = ssub.s32 512, 512
      %84 = vsyncadd [#allocation12], %s83
      %s85 = sshll.u32 [#allocation11], 4
      %s86 = int_to_ptr.vmem [resolvable:$true] %s85
      %91 = dma.hbm_to_vmem [thread:$0]  %s5, 512, %s86, [#allocation12], 128, 128, 8
    $region25: #{tpu_custom_call.1} parent=1 // pred_fallthru
      _
    // Predicated region
    $region26: #{tpu_custom_call.1} parent=1 // pred_check
      _
    $region27: #{tpu_custom_call.1} parent=1 // pred_check_branch
      %93 = sbr.rel (0) target = $region29
    $region28: #{tpu_custom_call.1} parent=1 // pred_region
      %s95 = ssub.s32 512, 512
      %96 = vsyncadd [#allocation12], %s95
      %s97 = sshll.u32 [#allocation13], 4
      %s98 = int_to_ptr.vmem [resolvable:$true] %s97
      %103 = dma.hbm_to_vmem [thread:$0]  %s6, 512, %s98, [#allocation12], 128, 128, 8
    $region29: #{tpu_custom_call.1} parent=1 // pred_fallthru
      _
    // Predicated region
    $region30: #{tpu_custom_call.1} parent=1 // pred_check
      _
    $region31: #{tpu_custom_call.1} parent=1 // pred_check_branch
      %105 = sbr.rel (0) target = $region33
    $region32: #{tpu_custom_call.1} parent=1 // pred_region
      %106 = dma.done [#allocation3], 256
    $region33: #{tpu_custom_call.1} parent=1 // pred_fallthru
      _
    // Predicated region
    $region34: #{tpu_custom_call.1} parent=1 // pred_check
      _
    $region35: #{tpu_custom_call.1} parent=1 // pred_check_branch
      %108 = sbr.rel (0) target = $region37
    $region36: #{tpu_custom_call.1} parent=1 // pred_region
      %109 = dma.done [#allocation6], 256
    $region37: #{tpu_custom_call.1} parent=1 // pred_fallthru
      _
    // Predicated region
    $region38: #{tpu_custom_call.1} parent=1 // pred_check
      _
    $region39: #{tpu_custom_call.1} parent=1 // pred_check_branch
      %111 = sbr.rel (0) target = $region41
    $region40: #{tpu_custom_call.1} parent=1 // pred_region
      %112 = dma.done [#allocation6], 256
    $region41: #{tpu_custom_call.1} parent=1 // pred_fallthru
      _
    // Predicated region
    $region42: #{tpu_custom_call.1} parent=1 // pred_check
      _
    $region43: #{tpu_custom_call.1} parent=1 // pred_check_branch
      %114 = sbr.rel (0) target = $region45
    $region44: #{tpu_custom_call.1} parent=1 // pred_region
      %115 = dma.done [#allocation9], 512
    $region45: #{tpu_custom_call.1} parent=1 // pred_fallthru
      _
    // Predicated region
    $region46: #{tpu_custom_call.1} parent=1 // pred_check
      _
    $region47: #{tpu_custom_call.1} parent=1 // pred_check_branch
      %117 = sbr.rel (0) target = $region49
    $region48: #{tpu_custom_call.1} parent=1 // pred_region
      %118 = dma.done [#allocation9], 512
    $region49: #{tpu_custom_call.1} parent=1 // pred_fallthru
      _
    // Predicated region
    $region50: #{tpu_custom_call.1} parent=1 // pred_check
      _
    $region51: #{tpu_custom_call.1} parent=1 // pred_check_branch
      %120 = sbr.rel (0) target = $region53
    $region52: #{tpu_custom_call.1} parent=1 // pred_region
      %121 = dma.done [#allocation12], 512
    $region53: #{tpu_custom_call.1} parent=1 // pred_fallthru
      _
    // Predicated region
    $region54: #{tpu_custom_call.1} parent=1 // pred_check
      _
    $region55: #{tpu_custom_call.1} parent=1 // pred_check_branch
      %123 = sbr.rel (0) target = $region57
    $region56: #{tpu_custom_call.1} parent=1 // pred_region
      %124 = dma.done [#allocation12], 512
    $region57: #{tpu_custom_call.1} parent=1 // pred_fallthru
      _
    %v125 = vld [vmem:[#allocation2] sm:$0xff]
    %v126 = vld [vmem:[#allocation2 + $0x8] sm:$0xff]
    %v127 = vld [vmem:[#allocation5] sm:$0xff]
    %v128 = vld [vmem:[#allocation5 + $0x8] sm:$0xff]
    %v129 = vld [vmem:[#allocation7] sm:$0xff]
    %v130 = vld [vmem:[#allocation7 + $0x8] sm:$0xff]
    %v131 = vld [vmem:[#allocation8] sm:$0xff]
    %v132 = vld [vmem:[#allocation8 + $0x8] sm:$0xff]
    %v133 = vld [vmem:[#allocation8 + $0x10] sm:$0xff]
    %v134 = vld [vmem:[#allocation8 + $0x18] sm:$0xff]
    %vm135 = vcmask 261120
    %v137 = vsel %vm135, %v125, 0
    %v140 = vsel %vm135, %v126, 0
    %142 = vmatprep.subr.mxu0 0.0
    %143 = vmatpush1.msra.mxu0 0.0
    %144 = vmatprep.subr.mxu0 0.0
    %145 = vmatpush1.msra.mxu0 0.0
    %146 = vmatprep.subr.mxu0 0.0
    %147 = vmatpush1.msra.mxu0 0.0
    %148 = vmatprep.subr.mxu0 0.0
    %149 = vmatpush1.msra.mxu0 0.0
    %150 = vmatprep.subr.mxu0 0.0
    %151 = vmatpush1.msra.mxu0 0.0
    %152 = vmatprep.subr.mxu0 0.0
    %153 = vmatpush1.msra.mxu0 0.0
    %154 = vmatprep.subr.mxu0 0.0
    %155 = vmatpush1.msra.mxu0 0.0
    %156 = vmatprep.subr.mxu0 0.0
    %157 = vmatpush1.msra.mxu0 0.0
    %158 = vmatprep.subr.mxu0 0.0
    %159 = vmatpush1.msra.mxu0 0.0
    %160 = vmatprep.subr.mxu0 0.0
    %161 = vmatpush1.msra.mxu0 0.0
    %162 = vmatprep.subr.mxu0 0.0
    %163 = vmatpush1.msra.mxu0 0.0
    %164 = vmatprep.subr.mxu0 0.0
    %165 = vmatpush1.msra.mxu0 0.0
    %166 = vmatprep.subr.mxu0 0.0
    %167 = vmatpush1.msra.mxu0 %v134
    %168 = vmatprep.subr.mxu0 0.0
    %169 = vmatpush1.msra.mxu0 %v133
    %170 = vmatprep.subr.mxu0 0.0
    %171 = vmatpush1.msra.mxu0 %v132
    %172 = vmatprep.subr.mxu0 0.0
    %173 = vmatpush1.msra.mxu0 %v131
    %174 = vmatprep.subr.mxu0 0.0
    %175 = vmatpush2.msra.mxu0 0.0
    %176 = vmatprep.subr.mxu0 0.0
    %177 = vmatpush2.msra.mxu0 0.0
    %178 = vmatprep.subr.mxu0 0.0
    %179 = vmatpush2.msra.mxu0 0.0
    %180 = vmatprep.subr.mxu0 0.0
    %181 = vmatpush2.msra.mxu0 0.0
    %182 = vmatprep.subr.mxu0 0.0
    %183 = vmatpush2.msra.mxu0 0.0
    %184 = vmatprep.subr.mxu0 0.0
    %185 = vmatpush2.msra.mxu0 0.0
    %186 = vmatprep.subr.mxu0 0.0
    %187 = vmatpush2.msra.mxu0 0.0
    %188 = vmatprep.subr.mxu0 0.0
    %189 = vmatpush2.msra.mxu0 0.0
    %190 = vmatprep.subr.mxu0 0.0
    %191 = vmatpush2.msra.mxu0 0.0
    %192 = vmatprep.subr.mxu0 0.0
    %193 = vmatpush2.msra.mxu0 0.0
    %194 = vmatprep.subr.mxu0 0.0
    %195 = vmatpush2.msra.mxu0 0.0
    %196 = vmatprep.subr.mxu0 0.0
    %197 = vmatpush2.msra.mxu0 0.0
    %198 = vmatprep.subr.mxu0 0.0
    %199 = vmatpush2.msra.mxu0 0.0
    %200 = vmatprep.subr.mxu0 0.0
    %201 = vmatpush2.msra.mxu0 0.0
    %202 = vmatprep.subr.mxu0 0.0
    %203 = vmatpush2.msra.mxu0 0.0
    %204 = vmatprep.subr.mxu0 0.0
    %205 = vmatpush2.msra.mxu0 0.0
    %206 = vmatprep.mubr.f32.mxu0 0.0
    %207 = vmatmul.mubr.f32.gmra.mxu0 %v137
    %v208 = vpop.f32.mrf.mxu0
    %v209 = vadd.f32 0.0, %v208
    %v210 = vpop.f32.mrf.mxu0
    %211 = vmatprep.mubr.f32.mxu0 0.0
    %212 = vmatmul.mubr.f32.gmra.mxu0 %v140
    %v213 = vpop.f32.mrf.mxu0
    %v214 = vadd.f32 0.0, %v213
    %v215 = vpop.f32.mrf.mxu0
    %216 = vdwg.mxu0
    %v217 = vld [vmem:[#allocation10] sm:$0xff]
    %v218 = vld [vmem:[#allocation10 + $0x8] sm:$0xff]
    %v219 = vld [vmem:[#allocation10 + $0x10] sm:$0xff]
    %v220 = vld [vmem:[#allocation10 + $0x18] sm:$0xff]
    %v222 = vsel %vm135, %v127, 0
    %v225 = vsel %vm135, %v128, 0
    %227 = vmatprep.subr.mxu0 0.0
    %228 = vmatpush1.msra.mxu0 0.0
    %229 = vmatprep.subr.mxu0 0.0
    %230 = vmatpush1.msra.mxu0 0.0
    %231 = vmatprep.subr.mxu0 0.0
    %232 = vmatpush1.msra.mxu0 0.0
    %233 = vmatprep.subr.mxu0 0.0
    %234 = vmatpush1.msra.mxu0 0.0
    %235 = vmatprep.subr.mxu0 0.0
    %236 = vmatpush1.msra.mxu0 0.0
    %237 = vmatprep.subr.mxu0 0.0
    %238 = vmatpush1.msra.mxu0 0.0
    %239 = vmatprep.subr.mxu0 0.0
    %240 = vmatpush1.msra.mxu0 0.0
    %241 = vmatprep.subr.mxu0 0.0
    %242 = vmatpush1.msra.mxu0 0.0
    %243 = vmatprep.subr.mxu0 0.0
    %244 = vmatpush1.msra.mxu0 0.0
    %245 = vmatprep.subr.mxu0 0.0
    %246 = vmatpush1.msra.mxu0 0.0
    %247 = vmatprep.subr.mxu0 0.0
    %248 = vmatpush1.msra.mxu0 0.0
    %249 = vmatprep.subr.mxu0 0.0
    %250 = vmatpush1.msra.mxu0 0.0
    %251 = vmatprep.subr.mxu0 0.0
    %252 = vmatpush1.msra.mxu0 %v220
    %253 = vmatprep.subr.mxu0 0.0
    %254 = vmatpush1.msra.mxu0 %v219
    %255 = vmatprep.subr.mxu0 0.0
    %256 = vmatpush1.msra.mxu0 %v218
    %257 = vmatprep.subr.mxu0 0.0
    %258 = vmatpush1.msra.mxu0 %v217
    %259 = vmatprep.subr.mxu0 0.0
    %260 = vmatpush2.msra.mxu0 0.0
    %261 = vmatprep.subr.mxu0 0.0
    %262 = vmatpush2.msra.mxu0 0.0
    %263 = vmatprep.subr.mxu0 0.0
    %264 = vmatpush2.msra.mxu0 0.0
    %265 = vmatprep.subr.mxu0 0.0
    %266 = vmatpush2.msra.mxu0 0.0
    %267 = vmatprep.subr.mxu0 0.0
    %268 = vmatpush2.msra.mxu0 0.0
    %269 = vmatprep.subr.mxu0 0.0
    %270 = vmatpush2.msra.mxu0 0.0
    %271 = vmatprep.subr.mxu0 0.0
    %272 = vmatpush2.msra.mxu0 0.0
    %273 = vmatprep.subr.mxu0 0.0
    %274 = vmatpush2.msra.mxu0 0.0
    %275 = vmatprep.subr.mxu0 0.0
    %276 = vmatpush2.msra.mxu0 0.0
    %277 = vmatprep.subr.mxu0 0.0
    %278 = vmatpush2.msra.mxu0 0.0
    %279 = vmatprep.subr.mxu0 0.0
    %280 = vmatpush2.msra.mxu0 0.0
    %281 = vmatprep.subr.mxu0 0.0
    %282 = vmatpush2.msra.mxu0 0.0
    %283 = vmatprep.subr.mxu0 0.0
    %284 = vmatpush2.msra.mxu0 0.0
    %285 = vmatprep.subr.mxu0 0.0
    %286 = vmatpush2.msra.mxu0 0.0
    %287 = vmatprep.subr.mxu0 0.0
    %288 = vmatpush2.msra.mxu0 0.0
    %289 = vmatprep.subr.mxu0 0.0
    %290 = vmatpush2.msra.mxu0 0.0
    %291 = vmatprep.mubr.f32.mxu0 0.0
    %292 = vmatmul.mubr.f32.gmra.mxu0 %v222
    %v293 = vpop.f32.mrf.mxu0
    %v294 = vadd.f32 0.0, %v293
    %v295 = vpop.f32.mrf.mxu0
    %296 = vmatprep.mubr.f32.mxu0 0.0
    %297 = vmatmul.mubr.f32.gmra.mxu0 %v225
    %v298 = vpop.f32.mrf.mxu0
    %v299 = vadd.f32 0.0, %v298
    %v300 = vpop.f32.mrf.mxu0
    %301 = vdwg.mxu0
    %v302 = vld [vmem:[#allocation11] sm:$0xff]
    %v303 = vld [vmem:[#allocation11 + $0x8] sm:$0xff]
    %v304 = vld [vmem:[#allocation11 + $0x10] sm:$0xff]
    %v305 = vld [vmem:[#allocation11 + $0x18] sm:$0xff]
    %v307 = vsel %vm135, %v129, 0
    %v310 = vsel %vm135, %v130, 0
    %312 = vmatprep.subr.mxu0 0.0
    %313 = vmatpush1.msra.mxu0 0.0
    %314 = vmatprep.subr.mxu0 0.0
    %315 = vmatpush1.msra.mxu0 0.0
    %316 = vmatprep.subr.mxu0 0.0
    %317 = vmatpush1.msra.mxu0 0.0
    %318 = vmatprep.subr.mxu0 0.0
    %319 = vmatpush1.msra.mxu0 0.0
    %320 = vmatprep.subr.mxu0 0.0
    %321 = vmatpush1.msra.mxu0 0.0
    %322 = vmatprep.subr.mxu0 0.0
    %323 = vmatpush1.msra.mxu0 0.0
    %324 = vmatprep.subr.mxu0 0.0
    %325 = vmatpush1.msra.mxu0 0.0
    %326 = vmatprep.subr.mxu0 0.0
    %327 = vmatpush1.msra.mxu0 0.0
    %328 = vmatprep.subr.mxu0 0.0
    %329 = vmatpush1.msra.mxu0 0.0
    %330 = vmatprep.subr.mxu0 0.0
    %331 = vmatpush1.msra.mxu0 0.0
    %332 = vmatprep.subr.mxu0 0.0
    %333 = vmatpush1.msra.mxu0 0.0
    %334 = vmatprep.subr.mxu0 0.0
    %335 = vmatpush1.msra.mxu0 0.0
    %336 = vmatprep.subr.mxu0 0.0
    %337 = vmatpush1.msra.mxu0 %v305
    %338 = vmatprep.subr.mxu0 0.0
    %339 = vmatpush1.msra.mxu0 %v304
    %340 = vmatprep.subr.mxu0 0.0
    %341 = vmatpush1.msra.mxu0 %v303
    %342 = vmatprep.subr.mxu0 0.0
    %343 = vmatpush1.msra.mxu0 %v302
    %344 = vmatprep.subr.mxu0 0.0
    %345 = vmatpush2.msra.mxu0 0.0
    %346 = vmatprep.subr.mxu0 0.0
    %347 = vmatpush2.msra.mxu0 0.0
    %348 = vmatprep.subr.mxu0 0.0
    %349 = vmatpush2.msra.mxu0 0.0
    %350 = vmatprep.subr.mxu0 0.0
    %351 = vmatpush2.msra.mxu0 0.0
    %352 = vmatprep.subr.mxu0 0.0
    %353 = vmatpush2.msra.mxu0 0.0
    %354 = vmatprep.subr.mxu0 0.0
    %355 = vmatpush2.msra.mxu0 0.0
    %356 = vmatprep.subr.mxu0 0.0
    %357 = vmatpush2.msra.mxu0 0.0
    %358 = vmatprep.subr.mxu0 0.0
    %359 = vmatpush2.msra.mxu0 0.0
    %360 = vmatprep.subr.mxu0 0.0
    %361 = vmatpush2.msra.mxu0 0.0
    %362 = vmatprep.subr.mxu0 0.0
    %363 = vmatpush2.msra.mxu0 0.0
    %364 = vmatprep.subr.mxu0 0.0
    %365 = vmatpush2.msra.mxu0 0.0
    %366 = vmatprep.subr.mxu0 0.0
    %367 = vmatpush2.msra.mxu0 0.0
    %368 = vmatprep.subr.mxu0 0.0
    %369 = vmatpush2.msra.mxu0 0.0
    %370 = vmatprep.subr.mxu0 0.0
    %371 = vmatpush2.msra.mxu0 0.0
    %372 = vmatprep.subr.mxu0 0.0
    %373 = vmatpush2.msra.mxu0 0.0
    %374 = vmatprep.subr.mxu0 0.0
    %375 = vmatpush2.msra.mxu0 0.0
    %376 = vmatprep.mubr.f32.mxu0 0.0
    %377 = vmatmul.mubr.f32.gmra.mxu0 %v307
    %v378 = vpop.f32.mrf.mxu0
    %v379 = vadd.f32 0.0, %v378
    %v380 = vpop.f32.mrf.mxu0
    %381 = vmatprep.mubr.f32.mxu0 0.0
    %382 = vmatmul.mubr.f32.gmra.mxu0 %v310
    %v383 = vpop.f32.mrf.mxu0
    %v384 = vadd.f32 0.0, %v383
    %v385 = vpop.f32.mrf.mxu0
    %386 = vdwg.mxu0
    %vm387 = vcmask 64512
    %v389 = vsel %vm387, %v209, 0
    %v392 = vsel %vm387, %v214, 0
    %v395 = vsel %vm387, %v294, 0
    %v398 = vsel %vm387, %v299, 0
    %400 = vmatprep.subr.mxu0 0.0
    %401 = vmatpush1.xpose.msra.mxu0 0.0
    %402 = vmatprep.subr.mxu0 0.0
    %403 = vmatpush1.xpose.msra.mxu0 0.0
    %404 = vmatprep.subr.mxu0 0.0
    %405 = vmatpush1.xpose.msra.mxu0 0.0
    %406 = vmatprep.subr.mxu0 0.0
    %407 = vmatpush1.xpose.msra.mxu0 0.0
    %408 = vmatprep.subr.mxu0 0.0
    %409 = vmatpush1.xpose.msra.mxu0 0.0
    %410 = vmatprep.subr.mxu0 0.0
    %411 = vmatpush1.xpose.msra.mxu0 0.0
    %412 = vmatprep.subr.mxu0 0.0
    %413 = vmatpush1.xpose.msra.mxu0 0.0
    %414 = vmatprep.subr.mxu0 0.0
    %415 = vmatpush1.xpose.msra.mxu0 0.0
    %416 = vmatprep.subr.mxu0 0.0
    %417 = vmatpush1.xpose.msra.mxu0 0.0
    %418 = vmatprep.subr.mxu0 0.0
    %419 = vmatpush1.xpose.msra.mxu0 0.0
    %420 = vmatprep.subr.mxu0 0.0
    %421 = vmatpush1.xpose.msra.mxu0 0.0
    %422 = vmatprep.subr.mxu0 0.0
    %423 = vmatpush1.xpose.msra.mxu0 0.0
    %424 = vmatprep.subr.mxu0 0.0
    %425 = vmatpush1.xpose.msra.mxu0 0.0
    %426 = vmatprep.subr.mxu0 0.0
    %427 = vmatpush1.xpose.msra.mxu0 0.0
    %428 = vmatprep.subr.mxu0 0.0
    %429 = vmatpush1.xpose.msra.mxu0 %v398
    %430 = vmatprep.subr.mxu0 0.0
    %431 = vmatpush1.xpose.msra.mxu0 %v395
    %432 = vmatprep.subr.mxu0 0.0
    %433 = vmatpush2.xpose.msra.mxu0 0.0
    %434 = vmatprep.subr.mxu0 0.0
    %435 = vmatpush2.xpose.msra.mxu0 0.0
    %436 = vmatprep.subr.mxu0 0.0
    %437 = vmatpush2.xpose.msra.mxu0 0.0
    %438 = vmatprep.subr.mxu0 0.0
    %439 = vmatpush2.xpose.msra.mxu0 0.0
    %440 = vmatprep.subr.mxu0 0.0
    %441 = vmatpush2.xpose.msra.mxu0 0.0
    %442 = vmatprep.subr.mxu0 0.0
    %443 = vmatpush2.xpose.msra.mxu0 0.0
    %444 = vmatprep.subr.mxu0 0.0
    %445 = vmatpush2.xpose.msra.mxu0 0.0
    %446 = vmatprep.subr.mxu0 0.0
    %447 = vmatpush2.xpose.msra.mxu0 0.0
    %448 = vmatprep.subr.mxu0 0.0
    %449 = vmatpush2.xpose.msra.mxu0 0.0
    %450 = vmatprep.subr.mxu0 0.0
    %451 = vmatpush2.xpose.msra.mxu0 0.0
    %452 = vmatprep.subr.mxu0 0.0
    %453 = vmatpush2.xpose.msra.mxu0 0.0
    %454 = vmatprep.subr.mxu0 0.0
    %455 = vmatpush2.xpose.msra.mxu0 0.0
    %456 = vmatprep.subr.mxu0 0.0
    %457 = vmatpush2.xpose.msra.mxu0 0.0
    %458 = vmatprep.subr.mxu0 0.0
    %459 = vmatpush2.xpose.msra.mxu0 0.0
    %460 = vmatprep.subr.mxu0 0.0
    %461 = vmatpush2.xpose.msra.mxu0 0.0
    %462 = vmatprep.subr.mxu0 0.0
    %463 = vmatpush2.xpose.msra.mxu0 0.0
    %464 = vmatprep.mubr.f32.mxu0 0.0
    %465 = vmatmul.mubr.f32.gmra.mxu0 %v389
    %v466 = vpop.f32.mrf.mxu0
    %v467 = vadd.f32 0.0, %v466
    %v468 = vpop.f32.mrf.mxu0
    %469 = vmatprep.mubr.f32.mxu0 0.0
    %470 = vmatmul.mubr.f32.gmra.mxu0 %v392
    %v471 = vpop.f32.mrf.mxu0
    %v472 = vadd.f32 0.0, %v471
    %v473 = vpop.f32.mrf.mxu0
    %474 = vdwg.mxu0
    %v475 = vmul.f32 %v467, 0.35355338
    %v476 = vmul.f32 %v472, 0.35355338
    %477 = vrot.lane.b32.xlu0 %v209, 120
    %v478 = vpop.permute.xlu0 %477
    %479 = vrot.lane.b32.xlu0 %v214, 120
    %v480 = vpop.permute.xlu0 %479
    %481 = vrot.lane.b32.xlu0 %v294, 120
    %v482 = vpop.permute.xlu0 %481
    %483 = vrot.lane.b32.xlu0 %v299, 120
    %v484 = vpop.permute.xlu0 %483
    %v485 = vsel %vm387, %v478, 0
    %v487 = vsel %vm387, %v480, 0
    %v489 = vsel %vm387, %v482, 0
    %v491 = vsel %vm387, %v484, 0
    %493 = vmatprep.subr.mxu0 0.0
    %494 = vmatpush1.xpose.msra.mxu0 0.0
    %495 = vmatprep.subr.mxu0 0.0
    %496 = vmatpush1.xpose.msra.mxu0 0.0
    %497 = vmatprep.subr.mxu0 0.0
    %498 = vmatpush1.xpose.msra.mxu0 0.0
    %499 = vmatprep.subr.mxu0 0.0
    %500 = vmatpush1.xpose.msra.mxu0 0.0
    %501 = vmatprep.subr.mxu0 0.0
    %502 = vmatpush1.xpose.msra.mxu0 0.0
    %503 = vmatprep.subr.mxu0 0.0
    %504 = vmatpush1.xpose.msra.mxu0 0.0
    %505 = vmatprep.subr.mxu0 0.0
    %506 = vmatpush1.xpose.msra.mxu0 0.0
    %507 = vmatprep.subr.mxu0 0.0
    %508 = vmatpush1.xpose.msra.mxu0 0.0
    %509 = vmatprep.subr.mxu0 0.0
    %510 = vmatpush1.xpose.msra.mxu0 0.0
    %511 = vmatprep.subr.mxu0 0.0
    %512 = vmatpush1.xpose.msra.mxu0 0.0
    %513 = vmatprep.subr.mxu0 0.0
    %514 = vmatpush1.xpose.msra.mxu0 0.0
    %515 = vmatprep.subr.mxu0 0.0
    %516 = vmatpush1.xpose.msra.mxu0 0.0
    %517 = vmatprep.subr.mxu0 0.0
    %518 = vmatpush1.xpose.msra.mxu0 0.0
    %519 = vmatprep.subr.mxu0 0.0
    %520 = vmatpush1.xpose.msra.mxu0 0.0
    %521 = vmatprep.subr.mxu0 0.0
    %522 = vmatpush1.xpose.msra.mxu0 %v491
    %523 = vmatprep.subr.mxu0 0.0
    %524 = vmatpush1.xpose.msra.mxu0 %v489
    %525 = vmatprep.subr.mxu0 0.0
    %526 = vmatpush2.xpose.msra.mxu0 0.0
    %527 = vmatprep.subr.mxu0 0.0
    %528 = vmatpush2.xpose.msra.mxu0 0.0
    %529 = vmatprep.subr.mxu0 0.0
    %530 = vmatpush2.xpose.msra.mxu0 0.0
    %531 = vmatprep.subr.mxu0 0.0
    %532 = vmatpush2.xpose.msra.mxu0 0.0
    %533 = vmatprep.subr.mxu0 0.0
    %534 = vmatpush2.xpose.msra.mxu0 0.0
    %535 = vmatprep.subr.mxu0 0.0
    %536 = vmatpush2.xpose.msra.mxu0 0.0
    %537 = vmatprep.subr.mxu0 0.0
    %538 = vmatpush2.xpose.msra.mxu0 0.0
    %539 = vmatprep.subr.mxu0 0.0
    %540 = vmatpush2.xpose.msra.mxu0 0.0
    %541 = vmatprep.subr.mxu0 0.0
    %542 = vmatpush2.xpose.msra.mxu0 0.0
    %543 = vmatprep.subr.mxu0 0.0
    %544 = vmatpush2.xpose.msra.mxu0 0.0
    %545 = vmatprep.subr.mxu0 0.0
    %546 = vmatpush2.xpose.msra.mxu0 0.0
    %547 = vmatprep.subr.mxu0 0.0
    %548 = vmatpush2.xpose.msra.mxu0 0.0
    %549 = vmatprep.subr.mxu0 0.0
    %550 = vmatpush2.xpose.msra.mxu0 0.0
    %551 = vmatprep.subr.mxu0 0.0
    %552 = vmatpush2.xpose.msra.mxu0 0.0
    %553 = vmatprep.subr.mxu0 0.0
    %554 = vmatpush2.xpose.msra.mxu0 0.0
    %555 = vmatprep.subr.mxu0 0.0
    %556 = vmatpush2.xpose.msra.mxu0 0.0
    %557 = vmatprep.mubr.f32.mxu0 0.0
    %558 = vmatmul.mubr.f32.gmra.mxu0 %v485
    %v559 = vpop.f32.mrf.mxu0
    %v560 = vadd.f32 0.0, %v559
    %v561 = vpop.f32.mrf.mxu0
    %562 = vmatprep.mubr.f32.mxu0 0.0
    %563 = vmatmul.mubr.f32.gmra.mxu0 %v487
    %v564 = vpop.f32.mrf.mxu0
    %v565 = vadd.f32 0.0, %v564
    %v566 = vpop.f32.mrf.mxu0
    %567 = vdwg.mxu0
    %v568 = vmul.f32 %v560, 0.35355338
    %v569 = vmul.f32 %v565, 0.35355338
    %570 = vrot.lane.b32.xlu0 %v209, 112
    %v571 = vpop.permute.xlu0 %570
    %572 = vrot.lane.b32.xlu0 %v214, 112
    %v573 = vpop.permute.xlu0 %572
    %574 = vrot.lane.b32.xlu0 %v294, 112
    %v575 = vpop.permute.xlu0 %574
    %576 = vrot.lane.b32.xlu0 %v299, 112
    %v577 = vpop.permute.xlu0 %576
    %v578 = vsel %vm387, %v571, 0
    %v580 = vsel %vm387, %v573, 0
    %v582 = vsel %vm387, %v575, 0
    %v584 = vsel %vm387, %v577, 0
    %586 = vmatprep.subr.mxu0 0.0
    %587 = vmatpush1.xpose.msra.mxu0 0.0
    %588 = vmatprep.subr.mxu0 0.0
    %589 = vmatpush1.xpose.msra.mxu0 0.0
    %590 = vmatprep.subr.mxu0 0.0
    %591 = vmatpush1.xpose.msra.mxu0 0.0
    %592 = vmatprep.subr.mxu0 0.0
    %593 = vmatpush1.xpose.msra.mxu0 0.0
    %594 = vmatprep.subr.mxu0 0.0
    %595 = vmatpush1.xpose.msra.mxu0 0.0
    %596 = vmatprep.subr.mxu0 0.0
    %597 = vmatpush1.xpose.msra.mxu0 0.0
    %598 = vmatprep.subr.mxu0 0.0
    %599 = vmatpush1.xpose.msra.mxu0 0.0
    %600 = vmatprep.subr.mxu0 0.0
    %601 = vmatpush1.xpose.msra.mxu0 0.0
    %602 = vmatprep.subr.mxu0 0.0
    %603 = vmatpush1.xpose.msra.mxu0 0.0
    %604 = vmatprep.subr.mxu0 0.0
    %605 = vmatpush1.xpose.msra.mxu0 0.0
    %606 = vmatprep.subr.mxu0 0.0
    %607 = vmatpush1.xpose.msra.mxu0 0.0
    %608 = vmatprep.subr.mxu0 0.0
    %609 = vmatpush1.xpose.msra.mxu0 0.0
    %610 = vmatprep.subr.mxu0 0.0
    %611 = vmatpush1.xpose.msra.mxu0 0.0
    %612 = vmatprep.subr.mxu0 0.0
    %613 = vmatpush1.xpose.msra.mxu0 0.0
    %614 = vmatprep.subr.mxu0 0.0
    %615 = vmatpush1.xpose.msra.mxu0 %v584
    %616 = vmatprep.subr.mxu0 0.0
    %617 = vmatpush1.xpose.msra.mxu0 %v582
    %618 = vmatprep.subr.mxu0 0.0
    %619 = vmatpush2.xpose.msra.mxu0 0.0
    %620 = vmatprep.subr.mxu0 0.0
    %621 = vmatpush2.xpose.msra.mxu0 0.0
    %622 = vmatprep.subr.mxu0 0.0
    %623 = vmatpush2.xpose.msra.mxu0 0.0
    %624 = vmatprep.subr.mxu0 0.0
    %625 = vmatpush2.xpose.msra.mxu0 0.0
    %626 = vmatprep.subr.mxu0 0.0
    %627 = vmatpush2.xpose.msra.mxu0 0.0
    %628 = vmatprep.subr.mxu0 0.0
    %629 = vmatpush2.xpose.msra.mxu0 0.0
    %630 = vmatprep.subr.mxu0 0.0
    %631 = vmatpush2.xpose.msra.mxu0 0.0
    %632 = vmatprep.subr.mxu0 0.0
    %633 = vmatpush2.xpose.msra.mxu0 0.0
    %634 = vmatprep.subr.mxu0 0.0
    %635 = vmatpush2.xpose.msra.mxu0 0.0
    %636 = vmatprep.subr.mxu0 0.0
    %637 = vmatpush2.xpose.msra.mxu0 0.0
    %638 = vmatprep.subr.mxu0 0.0
    %639 = vmatpush2.xpose.msra.mxu0 0.0
    %640 = vmatprep.subr.mxu0 0.0
    %641 = vmatpush2.xpose.msra.mxu0 0.0
    %642 = vmatprep.subr.mxu0 0.0
    %643 = vmatpush2.xpose.msra.mxu0 0.0
    %644 = vmatprep.subr.mxu0 0.0
    %645 = vmatpush2.xpose.msra.mxu0 0.0
    %646 = vmatprep.subr.mxu0 0.0
    %647 = vmatpush2.xpose.msra.mxu0 0.0
    %648 = vmatprep.subr.mxu0 0.0
    %649 = vmatpush2.xpose.msra.mxu0 0.0
    %650 = vmatprep.mubr.f32.mxu0 0.0
    %651 = vmatmul.mubr.f32.gmra.mxu0 %v578
    %v652 = vpop.f32.mrf.mxu0
    %v653 = vadd.f32 0.0, %v652
    %v654 = vpop.f32.mrf.mxu0
    %655 = vmatprep.mubr.f32.mxu0 0.0
    %656 = vmatmul.mubr.f32.gmra.mxu0 %v580
    %v657 = vpop.f32.mrf.mxu0
    %v658 = vadd.f32 0.0, %v657
    %v659 = vpop.f32.mrf.mxu0
    %660 = vdwg.mxu0
    %v661 = vmul.f32 %v653, 0.35355338
    %v662 = vmul.f32 %v658, 0.35355338
    %663 = vrot.lane.b32.xlu0 %v209, 104
    %v664 = vpop.permute.xlu0 %663
    %665 = vrot.lane.b32.xlu0 %v214, 104
    %v666 = vpop.permute.xlu0 %665
    %667 = vrot.lane.b32.xlu0 %v294, 104
    %v668 = vpop.permute.xlu0 %667
    %669 = vrot.lane.b32.xlu0 %v299, 104
    %v670 = vpop.permute.xlu0 %669
    %v671 = vsel %vm387, %v664, 0
    %v673 = vsel %vm387, %v666, 0
    %v675 = vsel %vm387, %v668, 0
    %v677 = vsel %vm387, %v670, 0
    %679 = vmatprep.subr.mxu0 0.0
    %680 = vmatpush1.xpose.msra.mxu0 0.0
    %681 = vmatprep.subr.mxu0 0.0
    %682 = vmatpush1.xpose.msra.mxu0 0.0
    %683 = vmatprep.subr.mxu0 0.0
    %684 = vmatpush1.xpose.msra.mxu0 0.0
    %685 = vmatprep.subr.mxu0 0.0
    %686 = vmatpush1.xpose.msra.mxu0 0.0
    %687 = vmatprep.subr.mxu0 0.0
    %688 = vmatpush1.xpose.msra.mxu0 0.0
    %689 = vmatprep.subr.mxu0 0.0
    %690 = vmatpush1.xpose.msra.mxu0 0.0
    %691 = vmatprep.subr.mxu0 0.0
    %692 = vmatpush1.xpose.msra.mxu0 0.0
    %693 = vmatprep.subr.mxu0 0.0
    %694 = vmatpush1.xpose.msra.mxu0 0.0
    %695 = vmatprep.subr.mxu0 0.0
    %696 = vmatpush1.xpose.msra.mxu0 0.0
    %697 = vmatprep.subr.mxu0 0.0
    %698 = vmatpush1.xpose.msra.mxu0 0.0
    %699 = vmatprep.subr.mxu0 0.0
    %700 = vmatpush1.xpose.msra.mxu0 0.0
    %701 = vmatprep.subr.mxu0 0.0
    %702 = vmatpush1.xpose.msra.mxu0 0.0
    %703 = vmatprep.subr.mxu0 0.0
    %704 = vmatpush1.xpose.msra.mxu0 0.0
    %705 = vmatprep.subr.mxu0 0.0
    %706 = vmatpush1.xpose.msra.mxu0 0.0
    %707 = vmatprep.subr.mxu0 0.0
    %708 = vmatpush1.xpose.msra.mxu0 %v677
    %709 = vmatprep.subr.mxu0 0.0
    %710 = vmatpush1.xpose.msra.mxu0 %v675
    %711 = vmatprep.subr.mxu0 0.0
    %712 = vmatpush2.xpose.msra.mxu0 0.0
    %713 = vmatprep.subr.mxu0 0.0
    %714 = vmatpush2.xpose.msra.mxu0 0.0
    %715 = vmatprep.subr.mxu0 0.0
    %716 = vmatpush2.xpose.msra.mxu0 0.0
    %717 = vmatprep.subr.mxu0 0.0
    %718 = vmatpush2.xpose.msra.mxu0 0.0
    %719 = vmatprep.subr.mxu0 0.0
    %720 = vmatpush2.xpose.msra.mxu0 0.0
    %721 = vmatprep.subr.mxu0 0.0
    %722 = vmatpush2.xpose.msra.mxu0 0.0
    %723 = vmatprep.subr.mxu0 0.0
    %724 = vmatpush2.xpose.msra.mxu0 0.0
    %725 = vmatprep.subr.mxu0 0.0
    %726 = vmatpush2.xpose.msra.mxu0 0.0
    %727 = vmatprep.subr.mxu0 0.0
    %728 = vmatpush2.xpose.msra.mxu0 0.0
    %729 = vmatprep.subr.mxu0 0.0
    %730 = vmatpush2.xpose.msra.mxu0 0.0
    %731 = vmatprep.subr.mxu0 0.0
    %732 = vmatpush2.xpose.msra.mxu0 0.0
    %733 = vmatprep.subr.mxu0 0.0
    %734 = vmatpush2.xpose.msra.mxu0 0.0
    %735 = vmatprep.subr.mxu0 0.0
    %736 = vmatpush2.xpose.msra.mxu0 0.0
    %737 = vmatprep.subr.mxu0 0.0
    %738 = vmatpush2.xpose.msra.mxu0 0.0
    %739 = vmatprep.subr.mxu0 0.0
    %740 = vmatpush2.xpose.msra.mxu0 0.0
    %741 = vmatprep.subr.mxu0 0.0
    %742 = vmatpush2.xpose.msra.mxu0 0.0
    %743 = vmatprep.mubr.f32.mxu0 0.0
    %744 = vmatmul.mubr.f32.gmra.mxu0 %v671
    %v745 = vpop.f32.mrf.mxu0
    %v746 = vadd.f32 0.0, %v745
    %v747 = vpop.f32.mrf.mxu0
    %748 = vmatprep.mubr.f32.mxu0 0.0
    %749 = vmatmul.mubr.f32.gmra.mxu0 %v673
    %v750 = vpop.f32.mrf.mxu0
    %v751 = vadd.f32 0.0, %v750
    %v752 = vpop.f32.mrf.mxu0
    %753 = vdwg.mxu0
    %v754 = vmul.f32 %v746, 0.35355338
    %v755 = vmul.f32 %v751, 0.35355338
    %v756 = vsel %vm387, %v475, -inf
    %757 = vmax.xlane.f32.xlu0 %v756
    %v758 = vpop.xlane.xlu0 %757
    %v759 = vsub.f32 %v475, %v758
    %v760 = vmul.f32 %v759, 1.442695
    %v761 = vpow.pop %v760
    %v762 = vsel %vm387, %v761, 0.0
    %763 = vadd.xlane.f32.xlu0 %v762
    %v764 = vpop.xlane.xlu0 %763
    %v765 = vrcp.pop %v764
    %v766 = vmul.f32 %v761, %v765
    %767 = vst.msk [vmem:[#allocation15] sm:$0xff] %vm387, %v766
    %v768 = vsel %vm387, %v568, -inf
    %769 = vmax.xlane.f32.xlu0 %v768
    %v770 = vpop.xlane.xlu0 %769
    %v771 = vsub.f32 %v568, %v770
    %v772 = vmul.f32 %v771, 1.442695
    %v773 = vpow.pop %v772
    %v774 = vsel %vm387, %v773, 0.0
    %775 = vadd.xlane.f32.xlu0 %v774
    %v776 = vpop.xlane.xlu0 %775
    %v777 = vrcp.pop %v776
    %v778 = vmul.f32 %v773, %v777
    %s779 = scalar_lea.vmem [#allocation15], 8
    %780 = vst.msk [vmem:[%s779] sm:$0xff] %vm387, %v778
    %v781 = vsel %vm387, %v661, -inf
    %782 = vmax.xlane.f32.xlu0 %v781
    %v783 = vpop.xlane.xlu0 %782
    %v784 = vsub.f32 %v661, %v783
    %v785 = vmul.f32 %v784, 1.442695
    %v786 = vpow.pop %v785
    %v787 = vsel %vm387, %v786, 0.0
    %788 = vadd.xlane.f32.xlu0 %v787
    %v789 = vpop.xlane.xlu0 %788
    %v790 = vrcp.pop %v789
    %v791 = vmul.f32 %v786, %v790
    %s792 = scalar_lea.vmem [#allocation15], 16
    %793 = vst.msk [vmem:[%s792] sm:$0xff] %vm387, %v791
    %v794 = vsel %vm387, %v754, -inf
    %795 = vmax.xlane.f32.xlu0 %v794
    %v796 = vpop.xlane.xlu0 %795
    %v797 = vsub.f32 %v754, %v796
    %v798 = vmul.f32 %v797, 1.442695
    %v799 = vpow.pop %v798
    %v800 = vsel %vm387, %v799, 0.0
    %801 = vadd.xlane.f32.xlu0 %v800
    %v802 = vpop.xlane.xlu0 %801
    %v803 = vrcp.pop %v802
    %v804 = vmul.f32 %v799, %v803
    %s805 = scalar_lea.vmem [#allocation15], 24
    %806 = vst.msk [vmem:[%s805] sm:$0xff] %vm387, %v804
    %v807 = vsel %vm135, %v379, 0.0
    %v808 = vrot.slane %v807, 4
    %v809 = vadd.f32 %v807, %v808
    %v810 = vrot.slane %v809, 2
    %v811 = vadd.f32 %v809, %v810
    %v812 = vrot.slane %v811, 1
    %v813 = vadd.f32 %v811, %v812
    %v814 = vld [vmem:[#allocation13] sm:$0xff]
    %v815 = vld [vmem:[#allocation13 + $0x8] sm:$0xff]
    %v816 = vld [vmem:[#allocation13 + $0x10] sm:$0xff]
    %v817 = vld [vmem:[#allocation13 + $0x18] sm:$0xff]
    %v819 = vsel %vm135, %v813, 0
    %821 = vmatprep.subr.mxu0 0.0
    %822 = vmatpush1.msra.mxu0 0.0
    %823 = vmatprep.subr.mxu0 0.0
    %824 = vmatpush1.msra.mxu0 0.0
    %825 = vmatprep.subr.mxu0 0.0
    %826 = vmatpush1.msra.mxu0 0.0
    %827 = vmatprep.subr.mxu0 0.0
    %828 = vmatpush1.msra.mxu0 0.0
    %829 = vmatprep.subr.mxu0 0.0
    %830 = vmatpush1.msra.mxu0 0.0
    %831 = vmatprep.subr.mxu0 0.0
    %832 = vmatpush1.msra.mxu0 0.0
    %833 = vmatprep.subr.mxu0 0.0
    %834 = vmatpush1.msra.mxu0 0.0
    %835 = vmatprep.subr.mxu0 0.0
    %836 = vmatpush1.msra.mxu0 0.0
    %837 = vmatprep.subr.mxu0 0.0
    %838 = vmatpush1.msra.mxu0 0.0
    %839 = vmatprep.subr.mxu0 0.0
    %840 = vmatpush1.msra.mxu0 0.0
    %841 = vmatprep.subr.mxu0 0.0
    %842 = vmatpush1.msra.mxu0 0.0
    %843 = vmatprep.subr.mxu0 0.0
    %844 = vmatpush1.msra.mxu0 0.0
    %845 = vmatprep.subr.mxu0 0.0
    %846 = vmatpush1.msra.mxu0 %v817
    %847 = vmatprep.subr.mxu0 0.0
    %848 = vmatpush1.msra.mxu0 %v816
    %849 = vmatprep.subr.mxu0 0.0
    %850 = vmatpush1.msra.mxu0 %v815
    %851 = vmatprep.subr.mxu0 0.0
    %852 = vmatpush1.msra.mxu0 %v814
    %853 = vmatprep.subr.mxu0 0.0
    %854 = vmatpush2.msra.mxu0 0.0
    %855 = vmatprep.subr.mxu0 0.0
    %856 = vmatpush2.msra.mxu0 0.0
    %857 = vmatprep.subr.mxu0 0.0
    %858 = vmatpush2.msra.mxu0 0.0
    %859 = vmatprep.subr.mxu0 0.0
    %860 = vmatpush2.msra.mxu0 0.0
    %861 = vmatprep.subr.mxu0 0.0
    %862 = vmatpush2.msra.mxu0 0.0
    %863 = vmatprep.subr.mxu0 0.0
    %864 = vmatpush2.msra.mxu0 0.0
    %865 = vmatprep.subr.mxu0 0.0
    %866 = vmatpush2.msra.mxu0 0.0
    %867 = vmatprep.subr.mxu0 0.0
    %868 = vmatpush2.msra.mxu0 0.0
    %869 = vmatprep.subr.mxu0 0.0
    %870 = vmatpush2.msra.mxu0 0.0
    %871 = vmatprep.subr.mxu0 0.0
    %872 = vmatpush2.msra.mxu0 0.0
    %873 = vmatprep.subr.mxu0 0.0
    %874 = vmatpush2.msra.mxu0 0.0
    %875 = vmatprep.subr.mxu0 0.0
    %876 = vmatpush2.msra.mxu0 0.0
    %877 = vmatprep.subr.mxu0 0.0
    %878 = vmatpush2.msra.mxu0 0.0
    %879 = vmatprep.subr.mxu0 0.0
    %880 = vmatpush2.msra.mxu0 0.0
    %881 = vmatprep.subr.mxu0 0.0
    %882 = vmatpush2.msra.mxu0 0.0
    %883 = vmatprep.subr.mxu0 0.0
    %884 = vmatpush2.msra.mxu0 0.0
    %885 = vmatprep.mubr.f32.mxu0 0.0
    %886 = vmatmul.mubr.f32.gmra.mxu0 %v819
    %v887 = vpop.f32.mrf.mxu0
    %v888 = vadd.f32 0.0, %v887
    %v889 = vpop.f32.mrf.mxu0
    %890 = vdwg.mxu0
    %v891 = vlaneseq
    %v892 = vshrl.u32 %v891, 7
    %v893 = vsub.s32 0, %v892
    %v894 = vrot.slane %v888, %v893
    %895 = vst.msk [vmem:[#allocation14] sm:$0xff] %vm135, %v894
    %vm896 = vcmask 130112
    %v897 = vsel %vm896, %v476, -inf
    %898 = vmax.xlane.f32.xlu0 %v897
    %v899 = vpop.xlane.xlu0 %898
    %v900 = vsub.f32 %v476, %v899
    %v901 = vmul.f32 %v900, 1.442695
    %v902 = vpow.pop %v901
    %904 = vrot.lane.b32.xlu0 %v902, 120
    %v905 = vpop.permute.xlu0 %904
    %v907 = vsel %vm387, %v905, 0.0
    %908 = vadd.xlane.f32.xlu0 %v907
    %v909 = vpop.xlane.xlu0 %908
    %v910 = vrcp.pop %v909
    %v911 = vmul.f32 %v902, %v910
    %913 = vrot.lane.b32.xlu0 %v911, 120
    %v914 = vpop.permute.xlu0 %913
    %s916 = scalar_lea.vmem [#allocation15], 32
    %917 = vst.msk [vmem:[%s916] sm:$0xff] %vm387, %v914
    %v918 = vsel %vm896, %v569, -inf
    %919 = vmax.xlane.f32.xlu0 %v918
    %v920 = vpop.xlane.xlu0 %919
    %v921 = vsub.f32 %v569, %v920
    %v922 = vmul.f32 %v921, 1.442695
    %v923 = vpow.pop %v922
    %925 = vrot.lane.b32.xlu0 %v923, 120
    %v926 = vpop.permute.xlu0 %925
    %v928 = vsel %vm387, %v926, 0.0
    %929 = vadd.xlane.f32.xlu0 %v928
    %v930 = vpop.xlane.xlu0 %929
    %v931 = vrcp.pop %v930
    %v932 = vmul.f32 %v923, %v931
    %934 = vrot.lane.b32.xlu0 %v932, 120
    %v935 = vpop.permute.xlu0 %934
    %s937 = scalar_lea.vmem [#allocation15], 40
    %938 = vst.msk [vmem:[%s937] sm:$0xff] %vm387, %v935
    %v939 = vsel %vm896, %v662, -inf
    %940 = vmax.xlane.f32.xlu0 %v939
    %v941 = vpop.xlane.xlu0 %940
    %v942 = vsub.f32 %v662, %v941
    %v943 = vmul.f32 %v942, 1.442695
    %v944 = vpow.pop %v943
    %946 = vrot.lane.b32.xlu0 %v944, 120
    %v947 = vpop.permute.xlu0 %946
    %v949 = vsel %vm387, %v947, 0.0
    %950 = vadd.xlane.f32.xlu0 %v949
    %v951 = vpop.xlane.xlu0 %950
    %v952 = vrcp.pop %v951
    %v953 = vmul.f32 %v944, %v952
    %955 = vrot.lane.b32.xlu0 %v953, 120
    %v956 = vpop.permute.xlu0 %955
    %s958 = scalar_lea.vmem [#allocation15], 48
    %959 = vst.msk [vmem:[%s958] sm:$0xff] %vm387, %v956
    %v960 = vsel %vm896, %v755, -inf
    %961 = vmax.xlane.f32.xlu0 %v960
    %v962 = vpop.xlane.xlu0 %961
    %v963 = vsub.f32 %v755, %v962
    %v964 = vmul.f32 %v963, 1.442695
    %v965 = vpow.pop %v964
    %967 = vrot.lane.b32.xlu0 %v965, 120
    %v968 = vpop.permute.xlu0 %967
    %v970 = vsel %vm387, %v968, 0.0
    %971 = vadd.xlane.f32.xlu0 %v970
    %v972 = vpop.xlane.xlu0 %971
    %v973 = vrcp.pop %v972
    %v974 = vmul.f32 %v965, %v973
    %976 = vrot.lane.b32.xlu0 %v974, 120
    %v977 = vpop.permute.xlu0 %976
    %s979 = scalar_lea.vmem [#allocation15], 56
    %980 = vst.msk [vmem:[%s979] sm:$0xff] %vm387, %v977
    %v981 = vsel %vm135, %v384, 0.0
    %v982 = vrot.slane %v981, 4
    %v983 = vadd.f32 %v981, %v982
    %v984 = vrot.slane %v983, 2
    %v985 = vadd.f32 %v983, %v984
    %v986 = vrot.slane %v985, 1
    %v987 = vadd.f32 %v985, %v986
    %v988 = vld [vmem:[#allocation13] sm:$0xff]
    %v989 = vld [vmem:[#allocation13 + $0x8] sm:$0xff]
    %v990 = vld [vmem:[#allocation13 + $0x10] sm:$0xff]
    %v991 = vld [vmem:[#allocation13 + $0x18] sm:$0xff]
    %v993 = vsel %vm135, %v987, 0
    %995 = vmatprep.subr.mxu0 0.0
    %996 = vmatpush1.msra.mxu0 0.0
    %997 = vmatprep.subr.mxu0 0.0
    %998 = vmatpush1.msra.mxu0 0.0
    %999 = vmatprep.subr.mxu0 0.0
    %1000 = vmatpush1.msra.mxu0 0.0
    %1001 = vmatprep.subr.mxu0 0.0
    %1002 = vmatpush1.msra.mxu0 0.0
    %1003 = vmatprep.subr.mxu0 0.0
    %1004 = vmatpush1.msra.mxu0 0.0
    %1005 = vmatprep.subr.mxu0 0.0
    %1006 = vmatpush1.msra.mxu0 0.0
    %1007 = vmatprep.subr.mxu0 0.0
    %1008 = vmatpush1.msra.mxu0 0.0
    %1009 = vmatprep.subr.mxu0 0.0
    %1010 = vmatpush1.msra.mxu0 0.0
    %1011 = vmatprep.subr.mxu0 0.0
    %1012 = vmatpush1.msra.mxu0 0.0
    %1013 = vmatprep.subr.mxu0 0.0
    %1014 = vmatpush1.msra.mxu0 0.0
    %1015 = vmatprep.subr.mxu0 0.0
    %1016 = vmatpush1.msra.mxu0 0.0
    %1017 = vmatprep.subr.mxu0 0.0
    %1018 = vmatpush1.msra.mxu0 0.0
    %1019 = vmatprep.subr.mxu0 0.0
    %1020 = vmatpush1.msra.mxu0 %v991
    %1021 = vmatprep.subr.mxu0 0.0
    %1022 = vmatpush1.msra.mxu0 %v990
    %1023 = vmatprep.subr.mxu0 0.0
    %1024 = vmatpush1.msra.mxu0 %v989
    %1025 = vmatprep.subr.mxu0 0.0
    %1026 = vmatpush1.msra.mxu0 %v988
    %1027 = vmatprep.subr.mxu0 0.0
    %1028 = vmatpush2.msra.mxu0 0.0
    %1029 = vmatprep.subr.mxu0 0.0
    %1030 = vmatpush2.msra.mxu0 0.0
    %1031 = vmatprep.subr.mxu0 0.0
    %1032 = vmatpush2.msra.mxu0 0.0
    %1033 = vmatprep.subr.mxu0 0.0
    %1034 = vmatpush2.msra.mxu0 0.0
    %1035 = vmatprep.subr.mxu0 0.0
    %1036 = vmatpush2.msra.mxu0 0.0
    %1037 = vmatprep.subr.mxu0 0.0
    %1038 = vmatpush2.msra.mxu0 0.0
    %1039 = vmatprep.subr.mxu0 0.0
    %1040 = vmatpush2.msra.mxu0 0.0
    %1041 = vmatprep.subr.mxu0 0.0
    %1042 = vmatpush2.msra.mxu0 0.0
    %1043 = vmatprep.subr.mxu0 0.0
    %1044 = vmatpush2.msra.mxu0 0.0
    %1045 = vmatprep.subr.mxu0 0.0
    %1046 = vmatpush2.msra.mxu0 0.0
    %1047 = vmatprep.subr.mxu0 0.0
    %1048 = vmatpush2.msra.mxu0 0.0
    %1049 = vmatprep.subr.mxu0 0.0
    %1050 = vmatpush2.msra.mxu0 0.0
    %1051 = vmatprep.subr.mxu0 0.0
    %1052 = vmatpush2.msra.mxu0 0.0
    %1053 = vmatprep.subr.mxu0 0.0
    %1054 = vmatpush2.msra.mxu0 0.0
    %1055 = vmatprep.subr.mxu0 0.0
    %1056 = vmatpush2.msra.mxu0 0.0
    %1057 = vmatprep.subr.mxu0 0.0
    %1058 = vmatpush2.msra.mxu0 0.0
    %1059 = vmatprep.mubr.f32.mxu0 0.0
    %1060 = vmatmul.mubr.f32.gmra.mxu0 %v993
    %v1061 = vpop.f32.mrf.mxu0
    %v1062 = vadd.f32 0.0, %v1061
    %v1063 = vpop.f32.mrf.mxu0
    %1064 = vdwg.mxu0
    %v1065 = vlaneseq
    %v1066 = vshrl.u32 %v1065, 7
    %v1067 = vsub.s32 0, %v1066
    %v1068 = vrot.slane %v1062, %v1067
    %s1069 = scalar_lea.vmem [#allocation14], 8
    %1070 = vst.msk [vmem:[%s1069] sm:$0xff] %vm135, %v1068
    // Predicated region
    $region58: #{tpu_custom_call.1} parent=1 // pred_check
      _
    $region59: #{tpu_custom_call.1} parent=1 // pred_check_branch
      %1072 = sbr.rel (0) target = $region61
    $region60: #{tpu_custom_call.1} parent=1 // pred_region
      %s1074 = ssub.s32 256, 256
      %1075 = vsyncadd [#allocation4], %s1074
      %s1076 = sshll.u32 [#allocation14], 4
      %s1077 = int_to_ptr.vmem [resolvable:$true] %s1076
      %1082 = dma.vmem_to_hbm [thread:$0]  %s1077, 256, %s7, [#allocation4], 128, 128, 8
    $region61: #{tpu_custom_call.1} parent=1 // pred_fallthru
      _
    // Predicated region
    $region62: #{tpu_custom_call.1} parent=1 // pred_check
      _
    $region63: #{tpu_custom_call.1} parent=1 // pred_check_branch
      %1084 = sbr.rel (0) target = $region65
    $region64: #{tpu_custom_call.1} parent=1 // pred_region
      %s1086 = ssub.s32 1024, 1024
      %1087 = vsyncadd [#allocation16], %s1086
      %s1088 = sshll.u32 [#allocation15], 4
      %s1089 = int_to_ptr.vmem [resolvable:$true] %s1088
      %1094 = dma.vmem_to_hbm [thread:$0]  %s1089, 1024, %s8, [#allocation16], 128, 128, 8
    $region65: #{tpu_custom_call.1} parent=1 // pred_fallthru
      _
    // Predicated region
    $region66: #{tpu_custom_call.1} parent=1 // pred_check
      _
    $region67: #{tpu_custom_call.1} parent=1 // pred_check_branch
      %1096 = sbr.rel (0) target = $region69
    $region68: #{tpu_custom_call.1} parent=1 // pred_region
      %1097 = dma.done [#allocation4], 256
    $region69: #{tpu_custom_call.1} parent=1 // pred_fallthru
      _
    // Predicated region
    $region70: #{tpu_custom_call.1} parent=1 // pred_check
      _
    $region71: #{tpu_custom_call.1} parent=1 // pred_check_branch
      %1099 = sbr.rel (0) target = $region73
    $region72: #{tpu_custom_call.1} parent=1 // pred_region
      %1100 = dma.done [#allocation16], 1024
    $region73: #{tpu_custom_call.1} parent=1 // pred_fallthru
      _
    %1101 = vsyncpa [#allocation3], 1
    %1102 = vsyncpa [#allocation6], 1
    %1103 = vsyncpa [#allocation9], 1
    %1104 = vsyncpa [#allocation12], 1
    %1105 = vsyncpa [#allocation4], 1
    %1106 = vsyncpa [#allocation16], 1

</llo_original>
